<compile_context>
chip_gen: v5e
topology: v5e:2x2
jax: 0.10.0
libtpu: 0.0.40
codegen_flags: <defaults>
</compile_context>

<pallas_src>
from functools import partial

import jax
import jax.numpy as jnp
from jax import lax
from jax.experimental import pallas as pl
from jax.experimental.pallas import tpu as pltpu

LANE = 128


def _round_up(v, m):
    return ((v + m - 1) // m) * m


# ------------------------- Fused Pallas kernel (hot path) -------------------------

def gnn_kernel(a_ref, x_ref, w_enc_ref, b_enc_ref, w_conv_ref, b_conv_ref, o_ref):
    """o = relu(A @ (... relu(A @ ((X@We+be) @ W0) + b0) ... @ W_{L-1}) + b_{L-1})."""
    num_layers = w_conv_ref.shape[0]

    # Input encoder: Linear + Identity. Cast of x to bf16 happens here (folded glue work).
    h = jnp.dot(x_ref[...].astype(jnp.bfloat16), w_enc_ref[...],
                preferred_element_type=jnp.float32)
    h = (h + b_enc_ref[...]).astype(jnp.bfloat16)          # keep activation bf16

    def layer(i, h):
        w = w_conv_ref[i]                                   # bf16 [P, P]
        b = b_conv_ref[i]                                   # f32  [1, P]
        # GCNConv: A_hat @ (H @ W) + b, then ReLU; dropout(p=0) is identity.
        xw = jnp.dot(h, w, preferred_element_type=jnp.float32)              # bf16 MXU, f32 acc
        agg = jnp.dot(a_ref[...], xw, preferred_element_type=jnp.float32)   # f32 A (accuracy)
        return jnp.maximum(agg + b, 0.0).astype(jnp.bfloat16)

    h = lax.fori_loop(0, num_layers, layer, h, unroll=True)
    o_ref[...] = h.astype(o_ref.dtype)


def fused_gnn_call(a_hat, x, kparams):
    """Single pallas_call for encoder + all GCN layers (all weights VMEM-resident)."""
    n, fin = x.shape
    w_enc, b_enc = kparams["enc"]
    w_conv, b_conv = kparams["conv"]
    num_layers, p, _ = w_conv.shape

    # Advisory roofline numbers so XLA schedules the tiny custom call sensibly.
    flops = 2 * n * fin * p + num_layers * (2 * n * p * p + 2 * n * n * p)
    bytes_accessed = (
        4 * (a_hat.size + x.size + n * p)          # f32: A, x, out
        + 2 * (w_enc.size + w_conv.size)           # bf16 weights
        + 4 * (b_enc.size + b_conv.size)           # f32 biases
    )

    return pl.pallas_call(
        gnn_kernel,
        out_shape=jax.ShapeDtypeStruct((n, p), jnp.float32),
        grid=(1,),
        in_specs=[
            pl.BlockSpec(a_hat.shape, lambda i: (0, 0)),
            pl.BlockSpec(x.shape, lambda i: (0, 0)),
            pl.BlockSpec(w_enc.shape, lambda i: (0, 0)),
            pl.BlockSpec(b_enc.shape, lambda i: (0, 0)),
            pl.BlockSpec(w_conv.shape, lambda i: (0, 0, 0)),
            pl.BlockSpec(b_conv.shape, lambda i: (0, 0, 0)),
        ],
        out_specs=pl.BlockSpec((n, p), lambda i: (0, 0)),
        compiler_params=pltpu.CompilerParams(
            dimension_semantics=("arbitrary",),
            vmem_limit_bytes=32 * 1024 * 1024,     # explicit budget; safe on v5e/v6e/v7x
        ),
        cost_estimate=pl.CostEstimate(
            flops=flops, transcendentals=0, bytes_accessed=bytes_accessed),
    )(a_hat, x, w_enc, b_enc, w_conv, b_conv)


def gnn_forward(kparams, x, a_hat, out_dim):
    """Forward pass. a_hat and kparams are precomputed once at setup time."""
    out = fused_gnn_call(a_hat, x, kparams)
    return out[:, :out_dim]                         # drop lane padding lazily


# ---------------- Glue (plain JAX, setup time): adjacency normalization, params ----------------

def gcn_norm_dense(edge_index, num_nodes):
    """Dense D^-1/2 (A + I_missing) D^-1/2 as in PyG gcn_norm (edge weights = 1).

    Self-loops are added only for nodes that do not already have one
    (add_remaining_self_loops semantics). Duplicate edges collapse to weight 1 in this
    dense build (irrelevant for simple graphs like the demo's ring).
    """
    src, dst = edge_index[0], edge_index[1]
    a = jnp.zeros((num_nodes, num_nodes), jnp.float32).at[dst, src].set(1.0)
    eye = jnp.eye(num_nodes, dtype=bool)
    a = jnp.where(eye, jnp.maximum(a, 1.0), a)
    deg = a.sum(axis=1)
    dinv = jnp.where(deg > 0, jax.lax.rsqrt(deg), 0.0)
    return dinv[:, None] * a * dinv[None, :]


def _dense_init(key, fan_in, fan_out):
    """Deterministic Linear-style init (uniform +-1/sqrt(fan_in)), weight stored [in, out]."""
    kw, kb = jax.random.split(key)
    bound = 1.0 / jnp.sqrt(jnp.float32(fan_in))
    w = jax.random.uniform(kw, (fan_in, fan_out), jnp.float32, -bound, bound)
    b = jax.random.uniform(kb, (fan_out,), jnp.float32, -bound, bound)
    return w, b


def init_gnn_params(key, in_features, encoder_features, hidden_channels):
    keys = jax.random.split(key, 1 + len(hidden_channels))
    params = {"enc": _dense_init(keys[0], in_features, encoder_features)}
    dims = [encoder_features] + list(hidden_channels)
    params["gcn"] = [
        _dense_init(keys[i + 1], dims[i], dims[i + 1]) for i in range(len(hidden_channels))
    ]
    return params


def prepare_kernel_params(params):
    """Pad feature dims to a common 128-multiple P (lane-dense), cast weights to bf16,
    stack conv layers into [L, P, P] / [L, 1, P]. Zero rows/cols are exact no-ops through
    matmul + bias + ReLU, so the unpadded slice of the result is unchanged."""
    w_enc, b_enc = params["enc"]
    conv = params["gcn"]
    dims = [w_enc.shape[1]] + [w.shape[0] for w, _ in conv] + [w.shape[1] for w, _ in conv]
    p = _round_up(max(dims), LANE)

    def pad_w(w):
        fi, fo = w.shape
        return jnp.pad(w, ((0, p - fi if w is not w_enc else 0), (0, p - fo)))

    def pad_b(b):
        return jnp.pad(b, (0, p - b.shape[0])).reshape(1, -1)

    w_enc_p = jnp.pad(w_enc, ((0, 0), (0, p - w_enc.shape[1]))).astype(jnp.bfloat16)
    b_enc_p = pad_b(b_enc).astype(jnp.float32)
    w_conv = jnp.stack([jnp.pad(w, ((0, p - w.shape[0]), (0, p - w.shape[1]))) for w, _ in conv]
                       ).astype(jnp.bfloat16)
    b_conv = jnp.stack([pad_b(b) for _, b in conv]).astype(jnp.float32)
    return {"enc": (w_enc_p, b_enc_p), "conv": (w_conv, b_conv)}


def reference_forward(params, x, a_hat):
    """Pure-JAX reference mirroring the kernel arithmetic (bf16 XW operands, f32 A, f32 acc)."""
    w_enc, b_enc = params["enc"]
    h = jnp.dot(x.astype(jnp.bfloat16), w_enc.astype(jnp.bfloat16),
                preferred_element_type=jnp.float32) + b_enc
    h = h.astype(jnp.bfloat16)
    for w, b in params["gcn"]:
        xw = jnp.dot(h, w.astype(jnp.bfloat16), preferred_element_type=jnp.float32)
        agg = jnp.dot(a_hat, xw, preferred_element_type=jnp.float32,
                      precision=lax.Precision.HIGHEST)
        h = jnp.maximum(agg + b, 0.0).astype(jnp.bfloat16)
    return h.astype(jnp.float32)


# ---------------- Demo ----------------

if __name__ == "__main__":
    N = 256                     # >=256 rows fills the MXU M-dim on v5e/v6e/v7x
    IN_FEATURES = 32
    ENCODER_FEATURES = 128
    HIDDEN = [64, 64, 64, 64]   # num_conv_layers = 4

    key = jax.random.PRNGKey(0)
    kx, kp = jax.random.split(key)
    x = jax.random.normal(kx, (N, IN_FEATURES), jnp.float32)

    # undirected ring graph (both directions), no explicit self-loops
    src = jnp.arange(N, dtype=jnp.int32)
    dst = (src + 1) % N
    edge_index = jnp.stack(
        [jnp.concatenate([src, dst]), jnp.concatenate([dst, src])], axis=0
    )

    params = init_gnn_params(kp, IN_FEATURES, ENCODER_FEATURES, HIDDEN)

    # Hoisted setup (static graph / static params): done once, outside the forward path.
    a_hat = gcn_norm_dense(edge_index, N)
    kparams = prepare_kernel_params(params)

    fwd = jax.jit(partial(gnn_forward, out_dim=HIDDEN[-1]))
    out = jax.block_until_ready(fwd(kparams, x, a_hat))

    ref = reference_forward(params, x, a_hat)
    assert out.shape == (N, HIDDEN[-1])
    max_err = float(jnp.max(jnp.abs(out - ref)))
    assert jnp.allclose(out, ref, atol=1e-2, rtol=1e-2), max_err

    print("KERNEL_OK")
</pallas_src>

<mosaic_0001>
module attributes {stable_mosaic.version = 11 : i64} {
  func.func @gnn_kernel(%arg0: i32, %arg1: memref<256x256xf32, #tpu.memory_space<vmem>>, %arg2: memref<256x32xf32, #tpu.memory_space<vmem>>, %arg3: memref<32x128xbf16, #tpu.memory_space<vmem>>, %arg4: memref<1x128xf32, #tpu.memory_space<vmem>>, %arg5: memref<4x128x128xbf16, #tpu.memory_space<vmem>>, %arg6: memref<4x1x128xf32, #tpu.memory_space<vmem>>, %arg7: memref<256x128xf32, #tpu.memory_space<vmem>>) attributes {dimension_semantics = [#tpu.dimension_semantics<arbitrary>], iteration_bounds = array<i64: 1>, scalar_prefetch = 0 : i64, scratch_operands = 0 : i64, tpu.core_type = #tpu.core_type<tc>, window_params = [{pipeline_mode = #tpu.pipeline_mode<synchronous>, transform_indices = @transform_0, window_bounds = array<i64: 256, 256>}, {pipeline_mode = #tpu.pipeline_mode<synchronous>, transform_indices = @transform_1, window_bounds = array<i64: 256, 32>}, {pipeline_mode = #tpu.pipeline_mode<synchronous>, transform_indices = @transform_2, window_bounds = array<i64: 32, 128>}, {pipeline_mode = #tpu.pipeline_mode<synchronous>, transform_indices = @transform_3, window_bounds = array<i64: 1, 128>}, {pipeline_mode = #tpu.pipeline_mode<synchronous>, transform_indices = @transform_4, window_bounds = array<i64: 4, 128, 128>}, {pipeline_mode = #tpu.pipeline_mode<synchronous>, transform_indices = @transform_5, window_bounds = array<i64: 4, 1, 128>}, {pipeline_mode = #tpu.pipeline_mode<synchronous>, transform_indices = @transform_6, window_bounds = array<i64: 256, 128>}]} {
    %c0 = arith.constant 0 : index
    %c0_0 = arith.constant 0 : index
    %0 = vector.load %arg2[%c0, %c0_0] : memref<256x32xf32, #tpu.memory_space<vmem>>, vector<256x32xf32>
    %1 = arith.truncf %0 : vector<256x32xf32> to vector<256x32xbf16>
    %c0_1 = arith.constant 0 : index
    %c0_2 = arith.constant 0 : index
    %2 = vector.load %arg3[%c0_1, %c0_2] : memref<32x128xbf16, #tpu.memory_space<vmem>>, vector<32x128xbf16>
    %cst = arith.constant dense<0.000000e+00> : vector<256x128xf32>
    %3 = tpu.matmul %1, %2, %cst {dimension_numbers = #tpu.dot_dimension_numbers<[1], [0], [0], [1], [0, 0, 1, 1], [], []>} : vector<256x32xbf16>, vector<32x128xbf16>, vector<256x128xf32> -> vector<256x128xf32>
    %c0_3 = arith.constant 0 : index
    %c0_4 = arith.constant 0 : index
    %4 = vector.load %arg4[%c0_3, %c0_4] : memref<1x128xf32, #tpu.memory_space<vmem>>, vector<1x128xf32>
    %5 = vector.broadcast %4 : vector<1x128xf32> to vector<256x128xf32>
    %6 = arith.addf %3, %5 : vector<256x128xf32>
    %7 = arith.truncf %6 : vector<256x128xf32> to vector<256x128xbf16>
    %c0_i32 = arith.constant 0 : i32
    %8 = arith.index_cast %c0_i32 : i32 to index
    %c0_5 = arith.constant 0 : index
    %c0_6 = arith.constant 0 : index
    %9 = vector.load %arg5[%8, %c0_5, %c0_6] : memref<4x128x128xbf16, #tpu.memory_space<vmem>>, vector<1x128x128xbf16>
    %10 = vector.shape_cast %9 : vector<1x128x128xbf16> to vector<128x128xbf16>
    %11 = arith.index_cast %c0_i32 : i32 to index
    %c0_7 = arith.constant 0 : index
    %c0_8 = arith.constant 0 : index
    %12 = vector.load %arg6[%11, %c0_7, %c0_8] : memref<4x1x128xf32, #tpu.memory_space<vmem>>, vector<1x1x128xf32>
    %13 = vector.shape_cast %12 : vector<1x1x128xf32> to vector<1x128xf32>
    %cst_9 = arith.constant dense<0.000000e+00> : vector<256x128xf32>
    %14 = tpu.matmul %7, %10, %cst_9 {dimension_numbers = #tpu.dot_dimension_numbers<[1], [0], [0], [1], [0, 0, 1, 1], [], []>} : vector<256x128xbf16>, vector<128x128xbf16>, vector<256x128xf32> -> vector<256x128xf32>
    %c0_10 = arith.constant 0 : index
    %c0_11 = arith.constant 0 : index
    %15 = vector.load %arg1[%c0_10, %c0_11] : memref<256x256xf32, #tpu.memory_space<vmem>>, vector<256x256xf32>
    %cst_12 = arith.constant dense<0.000000e+00> : vector<256x128xf32>
    %16 = tpu.matmul %15, %14, %cst_12 {dimension_numbers = #tpu.dot_dimension_numbers<[1], [0], [0], [1], [0, 0, 1, 1], [], []>} : vector<256x256xf32>, vector<256x128xf32>, vector<256x128xf32> -> vector<256x128xf32>
    %17 = vector.broadcast %13 : vector<1x128xf32> to vector<256x128xf32>
    %18 = arith.addf %16, %17 : vector<256x128xf32>
    %cst_13 = arith.constant 0.000000e+00 : f32
    %19 = vector.broadcast %cst_13 : f32 to vector<256x128xf32>
    %20 = arith.maximumf %18, %19 : vector<256x128xf32>
    %21 = arith.truncf %20 : vector<256x128xf32> to vector<256x128xbf16>
    %c1_i32 = arith.constant 1 : i32
    %22 = arith.index_cast %c1_i32 : i32 to index
    %c0_14 = arith.constant 0 : index
    %c0_15 = arith.constant 0 : index
    %23 = vector.load %arg5[%22, %c0_14, %c0_15] : memref<4x128x128xbf16, #tpu.memory_space<vmem>>, vector<1x128x128xbf16>
    %24 = vector.shape_cast %23 : vector<1x128x128xbf16> to vector<128x128xbf16>
    %25 = arith.index_cast %c1_i32 : i32 to index
    %c0_16 = arith.constant 0 : index
    %c0_17 = arith.constant 0 : index
    %26 = vector.load %arg6[%25, %c0_16, %c0_17] : memref<4x1x128xf32, #tpu.memory_space<vmem>>, vector<1x1x128xf32>
    %27 = vector.shape_cast %26 : vector<1x1x128xf32> to vector<1x128xf32>
    %cst_18 = arith.constant dense<0.000000e+00> : vector<256x128xf32>
    %28 = tpu.matmul %21, %24, %cst_18 {dimension_numbers = #tpu.dot_dimension_numbers<[1], [0], [0], [1], [0, 0, 1, 1], [], []>} : vector<256x128xbf16>, vector<128x128xbf16>, vector<256x128xf32> -> vector<256x128xf32>
    %c0_19 = arith.constant 0 : index
    %c0_20 = arith.constant 0 : index
    %29 = vector.load %arg1[%c0_19, %c0_20] : memref<256x256xf32, #tpu.memory_space<vmem>>, vector<256x256xf32>
    %cst_21 = arith.constant dense<0.000000e+00> : vector<256x128xf32>
    %30 = tpu.matmul %29, %28, %cst_21 {dimension_numbers = #tpu.dot_dimension_numbers<[1], [0], [0], [1], [0, 0, 1, 1], [], []>} : vector<256x256xf32>, vector<256x128xf32>, vector<256x128xf32> -> vector<256x128xf32>
    %31 = vector.broadcast %27 : vector<1x128xf32> to vector<256x128xf32>
    %32 = arith.addf %30, %31 : vector<256x128xf32>
    %cst_22 = arith.constant 0.000000e+00 : f32
    %33 = vector.broadcast %cst_22 : f32 to vector<256x128xf32>
    %34 = arith.maximumf %32, %33 : vector<256x128xf32>
    %35 = arith.truncf %34 : vector<256x128xf32> to vector<256x128xbf16>
    %c2_i32 = arith.constant 2 : i32
    %36 = arith.index_cast %c2_i32 : i32 to index
    %c0_23 = arith.constant 0 : index
    %c0_24 = arith.constant 0 : index
    %37 = vector.load %arg5[%36, %c0_23, %c0_24] : memref<4x128x128xbf16, #tpu.memory_space<vmem>>, vector<1x128x128xbf16>
    %38 = vector.shape_cast %37 : vector<1x128x128xbf16> to vector<128x128xbf16>
    %39 = arith.index_cast %c2_i32 : i32 to index
    %c0_25 = arith.constant 0 : index
    %c0_26 = arith.constant 0 : index
    %40 = vector.load %arg6[%39, %c0_25, %c0_26] : memref<4x1x128xf32, #tpu.memory_space<vmem>>, vector<1x1x128xf32>
    %41 = vector.shape_cast %40 : vector<1x1x128xf32> to vector<1x128xf32>
    %cst_27 = arith.constant dense<0.000000e+00> : vector<256x128xf32>
    %42 = tpu.matmul %35, %38, %cst_27 {dimension_numbers = #tpu.dot_dimension_numbers<[1], [0], [0], [1], [0, 0, 1, 1], [], []>} : vector<256x128xbf16>, vector<128x128xbf16>, vector<256x128xf32> -> vector<256x128xf32>
    %c0_28 = arith.constant 0 : index
    %c0_29 = arith.constant 0 : index
    %43 = vector.load %arg1[%c0_28, %c0_29] : memref<256x256xf32, #tpu.memory_space<vmem>>, vector<256x256xf32>
    %cst_30 = arith.constant dense<0.000000e+00> : vector<256x128xf32>
    %44 = tpu.matmul %43, %42, %cst_30 {dimension_numbers = #tpu.dot_dimension_numbers<[1], [0], [0], [1], [0, 0, 1, 1], [], []>} : vector<256x256xf32>, vector<256x128xf32>, vector<256x128xf32> -> vector<256x128xf32>
    %45 = vector.broadcast %41 : vector<1x128xf32> to vector<256x128xf32>
    %46 = arith.addf %44, %45 : vector<256x128xf32>
    %cst_31 = arith.constant 0.000000e+00 : f32
    %47 = vector.broadcast %cst_31 : f32 to vector<256x128xf32>
    %48 = arith.maximumf %46, %47 : vector<256x128xf32>
    %49 = arith.truncf %48 : vector<256x128xf32> to vector<256x128xbf16>
    %c3_i32 = arith.constant 3 : i32
    %50 = arith.index_cast %c3_i32 : i32 to index
    %c0_32 = arith.constant 0 : index
    %c0_33 = arith.constant 0 : index
    %51 = vector.load %arg5[%50, %c0_32, %c0_33] : memref<4x128x128xbf16, #tpu.memory_space<vmem>>, vector<1x128x128xbf16>
    %52 = vector.shape_cast %51 : vector<1x128x128xbf16> to vector<128x128xbf16>
    %53 = arith.index_cast %c3_i32 : i32 to index
    %c0_34 = arith.constant 0 : index
    %c0_35 = arith.constant 0 : index
    %54 = vector.load %arg6[%53, %c0_34, %c0_35] : memref<4x1x128xf32, #tpu.memory_space<vmem>>, vector<1x1x128xf32>
    %55 = vector.shape_cast %54 : vector<1x1x128xf32> to vector<1x128xf32>
    %cst_36 = arith.constant dense<0.000000e+00> : vector<256x128xf32>
    %56 = tpu.matmul %49, %52, %cst_36 {dimension_numbers = #tpu.dot_dimension_numbers<[1], [0], [0], [1], [0, 0, 1, 1], [], []>} : vector<256x128xbf16>, vector<128x128xbf16>, vector<256x128xf32> -> vector<256x128xf32>
    %c0_37 = arith.constant 0 : index
    %c0_38 = arith.constant 0 : index
    %57 = vector.load %arg1[%c0_37, %c0_38] : memref<256x256xf32, #tpu.memory_space<vmem>>, vector<256x256xf32>
    %cst_39 = arith.constant dense<0.000000e+00> : vector<256x128xf32>
    %58 = tpu.matmul %57, %56, %cst_39 {dimension_numbers = #tpu.dot_dimension_numbers<[1], [0], [0], [1], [0, 0, 1, 1], [], []>} : vector<256x256xf32>, vector<256x128xf32>, vector<256x128xf32> -> vector<256x128xf32>
    %59 = vector.broadcast %55 : vector<1x128xf32> to vector<256x128xf32>
    %60 = arith.addf %58, %59 : vector<256x128xf32>
    %cst_40 = arith.constant 0.000000e+00 : f32
    %61 = vector.broadcast %cst_40 : f32 to vector<256x128xf32>
    %62 = arith.maximumf %60, %61 : vector<256x128xf32>
    %63 = arith.truncf %62 : vector<256x128xf32> to vector<256x128xbf16>
    %c4_i32 = arith.constant 4 : i32
    %64 = arith.extf %63 : vector<256x128xbf16> to vector<256x128xf32>
    %c0_41 = arith.constant 0 : index
    %c0_42 = arith.constant 0 : index
    %65 = vector.load %arg7[%c0_41, %c0_42] : memref<256x128xf32, #tpu.memory_space<vmem>>, vector<256x128xf32>
    tpu.vector_store %arg7[%c0_41, %c0_42], %64 {strides = array<i32>} : memref<256x128xf32, #tpu.memory_space<vmem>>, vector<256x128xf32>,
    return
  }
  func.func @transform_0(%arg0: i32) -> (i32, i32) {
    %c0_i32 = arith.constant 0 : i32
    %c0_i32_0 = arith.constant 0 : i32
    %c0_i32_1 = arith.constant 0 : i32
    return %c0_i32, %c0_i32_0 : i32, i32
  }
  func.func @transform_1(%arg0: i32) -> (i32, i32) {
    %c0_i32 = arith.constant 0 : i32
    %c0_i32_0 = arith.constant 0 : i32
    %c0_i32_1 = arith.constant 0 : i32
    return %c0_i32, %c0_i32_0 : i32, i32
  }
  func.func @transform_2(%arg0: i32) -> (i32, i32) {
    %c0_i32 = arith.constant 0 : i32
    %c0_i32_0 = arith.constant 0 : i32
    %c0_i32_1 = arith.constant 0 : i32
    return %c0_i32, %c0_i32_0 : i32, i32
  }
  func.func @transform_3(%arg0: i32) -> (i32, i32) {
    %c0_i32 = arith.constant 0 : i32
    %c0_i32_0 = arith.constant 0 : i32
    %c0_i32_1 = arith.constant 0 : i32
    return %c0_i32, %c0_i32_0 : i32, i32
  }
  func.func @transform_4(%arg0: i32) -> (i32, i32, i32) {
    %c0_i32 = arith.constant 0 : i32
    %c0_i32_0 = arith.constant 0 : i32
    %c0_i32_1 = arith.constant 0 : i32
    %c0_i32_2 = arith.constant 0 : i32
    return %c0_i32, %c0_i32_0, %c0_i32_1 : i32, i32, i32
  }
  func.func @transform_5(%arg0: i32) -> (i32, i32, i32) {
    %c0_i32 = arith.constant 0 : i32
    %c0_i32_0 = arith.constant 0 : i32
    %c0_i32_1 = arith.constant 0 : i32
    %c0_i32_2 = arith.constant 0 : i32
    return %c0_i32, %c0_i32_0, %c0_i32_1 : i32, i32, i32
  }
  func.func @transform_6(%arg0: i32) -> (i32, i32) {
    %c0_i32 = arith.constant 0 : i32
    %c0_i32_0 = arith.constant 0 : i32
    %c0_i32_1 = arith.constant 0 : i32
    return %c0_i32, %c0_i32_0 : i32, i32
  }
}

</mosaic_0001>

<llo_original>
// kernel: gnn_forward.1
$region0: #{gnn_forward.1}
  #allocation0 [shape = 'u32[]', space=smem, size = 0x4, offset = 0x4, fixed_abs, tag = 'smem constant byte address 0x4 - core index']
  #allocation1 [shape = 'u32[72,128]{1,0:T(1,128)}', space=vmem, size = 0x9000, scoped, tag = 'internal scratch']
  %s0 = inlined_call_operand.hbm [shape: f32[256,256], index: 0, kind: input, shape index: {}]
  %s1 = inlined_call_operand.vmem [shape: f32[256,32], index: 1, kind: input, shape index: {}]
  %s2 = inlined_call_operand.vmem [shape: bf16[32,128], index: 2, kind: input, shape index: {}]
  %s3 = inlined_call_operand.vmem [shape: f32[1,128], index: 3, kind: input, shape index: {}]
  %s4 = inlined_call_operand.vmem [shape: bf16[4,128,128], index: 4, kind: input, shape index: {}]
  %s5 = inlined_call_operand.vmem [shape: f32[4,1,128], index: 5, kind: input, shape index: {}]
  %s6 = inlined_call_operand.vmem [shape: f32[256,128], index: 6, kind: output, shape index: {}]
  %s7 = sld [smem:[#allocation0]]
  $region38: #{gnn_forward.1} parent=0
    _
  %s9 = ssub.s32 1, %s7
  %s10 = scalar_select 0, %s9, %s7
  $region1: #{gnn_forward.1} parent=0
    #allocation2 [shape = 'u8[262144]{0}', space=vmem, size = 0x40000, scoped, tag = 'input window, operand 0, single buffered']
    #allocation3 [shape = 's32[1]{0}', space=sflag, size = 0x4, scoped, tag = 'scoped memory for gnn_forward.1']
    %11 = vsyncpa [#allocation3], 0
    // Predicated region
    $region2: #{gnn_forward.1} parent=1 // pred_check
      _
    $region3: #{gnn_forward.1} parent=1 // pred_check_branch
      %13 = sbr.rel (0) target = $region5
    $region4: #{gnn_forward.1} parent=1 // pred_region
      %15 = vsyncadd [#allocation3], 0
      %s16 = sshll.u32 %s0, 4
      %s17 = int_to_ptr.hbm [resolvable:$true] %s16
      %s18 = sshll.u32 [#allocation2], 4
      %s19 = int_to_ptr.vmem [resolvable:$true] %s18
      %24 = dma.hbm_to_vmem [thread:$0]  %s17, 8192, %s19, [#allocation3], 256, 256, 16
    $region5: #{gnn_forward.1} parent=1 // pred_fallthru
      _
    // Predicated region
    $region6: #{gnn_forward.1} parent=1 // pred_check
      _
    $region7: #{gnn_forward.1} parent=1 // pred_check_branch
      %26 = sbr.rel (0) target = $region9
    $region8: #{gnn_forward.1} parent=1 // pred_region
      _
    $region9: #{gnn_forward.1} parent=1 // pred_fallthru
      _
    // Predicated region
    $region10: #{gnn_forward.1} parent=1 // pred_check
      _
    $region11: #{gnn_forward.1} parent=1 // pred_check_branch
      %28 = sbr.rel (0) target = $region13
    $region12: #{gnn_forward.1} parent=1 // pred_region
      _
    $region13: #{gnn_forward.1} parent=1 // pred_fallthru
      _
    // Predicated region
    $region14: #{gnn_forward.1} parent=1 // pred_check
      _
    $region15: #{gnn_forward.1} parent=1 // pred_check_branch
      %30 = sbr.rel (0) target = $region17
    $region16: #{gnn_forward.1} parent=1 // pred_region
      _
    $region17: #{gnn_forward.1} parent=1 // pred_fallthru
      _
    // Predicated region
    $region18: #{gnn_forward.1} parent=1 // pred_check
      _
    $region19: #{gnn_forward.1} parent=1 // pred_check_branch
      %32 = sbr.rel (0) target = $region21
    $region20: #{gnn_forward.1} parent=1 // pred_region
      _
    $region21: #{gnn_forward.1} parent=1 // pred_fallthru
      _
    // Predicated region
    $region22: #{gnn_forward.1} parent=1 // pred_check
      _
    $region23: #{gnn_forward.1} parent=1 // pred_check_branch
      %34 = sbr.rel (0) target = $region25
    $region24: #{gnn_forward.1} parent=1 // pred_region
      _
    $region25: #{gnn_forward.1} parent=1 // pred_fallthru
      _
    // Predicated region
    $region26: #{gnn_forward.1} parent=1 // pred_check
      _
    $region27: #{gnn_forward.1} parent=1 // pred_check_branch
      %36 = sbr.rel (0) target = $region29
    $region28: #{gnn_forward.1} parent=1 // pred_region
      %38 = dma.done [#allocation3], 8192
    $region29: #{gnn_forward.1} parent=1 // pred_fallthru
      _
    %v40 = vld [vmem:[%s1] sm:$0xff]
    %v41 = vld [vmem:[%s1 + $0x8] sm:$0xff]
    %v42 = vld [vmem:[%s1 + $0x10] sm:$0xff]
    %v43 = vld [vmem:[%s1 + $0x18] sm:$0xff]
    %v44 = vld [vmem:[%s1 + $0x20] sm:$0xff]
    %v45 = vld [vmem:[%s1 + $0x28] sm:$0xff]
    %v46 = vld [vmem:[%s1 + $0x30] sm:$0xff]
    %v47 = vld [vmem:[%s1 + $0x38] sm:$0xff]
    %v48 = vld [vmem:[%s1 + $0x40] sm:$0xff]
    %v49 = vld [vmem:[%s1 + $0x48] sm:$0xff]
    %v50 = vld [vmem:[%s1 + $0x50] sm:$0xff]
    %v51 = vld [vmem:[%s1 + $0x58] sm:$0xff]
    %v52 = vld [vmem:[%s1 + $0x60] sm:$0xff]
    %v53 = vld [vmem:[%s1 + $0x68] sm:$0xff]
    %v54 = vld [vmem:[%s1 + $0x70] sm:$0xff]
    %v55 = vld [vmem:[%s1 + $0x78] sm:$0xff]
    %v56 = vld [vmem:[%s1 + $0x80] sm:$0xff]
    %v57 = vld [vmem:[%s1 + $0x88] sm:$0xff]
    %v58 = vld [vmem:[%s1 + $0x90] sm:$0xff]
    %v59 = vld [vmem:[%s1 + $0x98] sm:$0xff]
    %v60 = vld [vmem:[%s1 + $0xa0] sm:$0xff]
    %v61 = vld [vmem:[%s1 + $0xa8] sm:$0xff]
    %v62 = vld [vmem:[%s1 + $0xb0] sm:$0xff]
    %v63 = vld [vmem:[%s1 + $0xb8] sm:$0xff]
    %v64 = vld [vmem:[%s1 + $0xc0] sm:$0xff]
    %v65 = vld [vmem:[%s1 + $0xc8] sm:$0xff]
    %v66 = vld [vmem:[%s1 + $0xd0] sm:$0xff]
    %v67 = vld [vmem:[%s1 + $0xd8] sm:$0xff]
    %v68 = vld [vmem:[%s1 + $0xe0] sm:$0xff]
    %v69 = vld [vmem:[%s1 + $0xe8] sm:$0xff]
    %v70 = vld [vmem:[%s1 + $0xf0] sm:$0xff]
    %v71 = vld [vmem:[%s1 + $0xf8] sm:$0xff]
    %v72 = vpack.c.bf16 %v41, %v40
    %v73 = vpack.c.bf16 %v43, %v42
    %v74 = vpack.c.bf16 %v45, %v44
    %v75 = vpack.c.bf16 %v47, %v46
    %v76 = vpack.c.bf16 %v49, %v48
    %v77 = vpack.c.bf16 %v51, %v50
    %v78 = vpack.c.bf16 %v53, %v52
    %v79 = vpack.c.bf16 %v55, %v54
    %v80 = vpack.c.bf16 %v57, %v56
    %v81 = vpack.c.bf16 %v59, %v58
    %v82 = vpack.c.bf16 %v61, %v60
    %v83 = vpack.c.bf16 %v63, %v62
    %v84 = vpack.c.bf16 %v65, %v64
    %v85 = vpack.c.bf16 %v67, %v66
    %v86 = vpack.c.bf16 %v69, %v68
    %v87 = vpack.c.bf16 %v71, %v70
    %v88 = vld [vmem:[%s2] sm:$0xf]
    %v89 = vld [vmem:[%s2 + $0x4] sm:$0xf]
    %v90 = vld [vmem:[%s2 + $0x8] sm:$0xf]
    %v91 = vld [vmem:[%s2 + $0xc] sm:$0xf]
    %v92 = vld [vmem:[%s3] sm:$0x1]
    %v94 = vperm.slane %v92, 0
    %v100 = vunpack.c.l.b16 %v88
    %v101 = vunpack.c.l.b16 %v89
    %v102 = vunpack.c.l.b16 %v90
    %v103 = vunpack.c.l.b16 %v91
    %v104 = vpack.c.b16 %v101, %v100
    %v105 = vpack.c.b16 %v103, %v102
    %vm108 = vcmask 261120
    %v110 = vsel %vm108, %v72, 0
    %v113 = vsel %vm108, %v73, 0
    %v116 = vsel %vm108, %v74, 0
    %v119 = vsel %vm108, %v75, 0
    %v122 = vsel %vm108, %v76, 0
    %v125 = vsel %vm108, %v77, 0
    %v128 = vsel %vm108, %v78, 0
    %v131 = vsel %vm108, %v79, 0
    %v134 = vsel %vm108, %v80, 0
    %v137 = vsel %vm108, %v81, 0
    %v140 = vsel %vm108, %v82, 0
    %v143 = vsel %vm108, %v83, 0
    %v146 = vsel %vm108, %v84, 0
    %v149 = vsel %vm108, %v85, 0
    %v152 = vsel %vm108, %v86, 0
    %v155 = vsel %vm108, %v87, 0
    %157 = vmatpush.bf16.msra.mxu0 0
    %158 = vmatpush.bf16.msra.mxu0 0
    %159 = vmatpush.bf16.msra.mxu0 0
    %160 = vmatpush.bf16.msra.mxu0 0
    %161 = vmatpush.bf16.msra.mxu0 0
    %162 = vmatpush.bf16.msra.mxu0 0
    %163 = vmatpush.bf16.msra.mxu0 %v105
    %164 = vmatpush.bf16.msra.mxu0 %v104
    %165 = vmatmul.bf16.gmra.mxu0 %v110
    %v166 = vpop.f32.mrf.mxu0
    %v167 = vadd.f32 %v94, %v166
    %v168 = vpop.f32.mrf.mxu0
    %v169 = vadd.f32 %v94, %v168
    %170 = vmatmul.bf16.gmra.mxu0 %v113
    %v171 = vpop.f32.mrf.mxu0
    %v172 = vadd.f32 %v94, %v171
    %v173 = vpop.f32.mrf.mxu0
    %v174 = vadd.f32 %v94, %v173
    %175 = vmatmul.bf16.gmra.mxu0 %v116
    %v176 = vpop.f32.mrf.mxu0
    %v177 = vadd.f32 %v94, %v176
    %v178 = vpop.f32.mrf.mxu0
    %v179 = vadd.f32 %v94, %v178
    %180 = vmatmul.bf16.gmra.mxu0 %v119
    %v181 = vpop.f32.mrf.mxu0
    %v182 = vadd.f32 %v94, %v181
    %v183 = vpop.f32.mrf.mxu0
    %v184 = vadd.f32 %v94, %v183
    %185 = vmatmul.bf16.gmra.mxu0 %v122
    %v186 = vpop.f32.mrf.mxu0
    %v187 = vadd.f32 %v94, %v186
    %v188 = vpop.f32.mrf.mxu0
    %v189 = vadd.f32 %v94, %v188
    %190 = vmatmul.bf16.gmra.mxu0 %v125
    %v191 = vpop.f32.mrf.mxu0
    %v192 = vadd.f32 %v94, %v191
    %v193 = vpop.f32.mrf.mxu0
    %v194 = vadd.f32 %v94, %v193
    %195 = vmatmul.bf16.gmra.mxu0 %v128
    %v196 = vpop.f32.mrf.mxu0
    %v197 = vadd.f32 %v94, %v196
    %v198 = vpop.f32.mrf.mxu0
    %v199 = vadd.f32 %v94, %v198
    %200 = vmatmul.bf16.gmra.mxu0 %v131
    %v201 = vpop.f32.mrf.mxu0
    %v202 = vadd.f32 %v94, %v201
    %v203 = vpop.f32.mrf.mxu0
    %v204 = vadd.f32 %v94, %v203
    %205 = vmatmul.bf16.gmra.mxu0 %v134
    %v206 = vpop.f32.mrf.mxu0
    %v207 = vadd.f32 %v94, %v206
    %v208 = vpop.f32.mrf.mxu0
    %v209 = vadd.f32 %v94, %v208
    %210 = vmatmul.bf16.gmra.mxu0 %v137
    %v211 = vpop.f32.mrf.mxu0
    %v212 = vadd.f32 %v94, %v211
    %v213 = vpop.f32.mrf.mxu0
    %v214 = vadd.f32 %v94, %v213
    %215 = vmatmul.bf16.gmra.mxu0 %v140
    %v216 = vpop.f32.mrf.mxu0
    %v217 = vadd.f32 %v94, %v216
    %v218 = vpop.f32.mrf.mxu0
    %v219 = vadd.f32 %v94, %v218
    %220 = vmatmul.bf16.gmra.mxu0 %v143
    %v221 = vpop.f32.mrf.mxu0
    %v222 = vadd.f32 %v94, %v221
    %v223 = vpop.f32.mrf.mxu0
    %v224 = vadd.f32 %v94, %v223
    %225 = vmatmul.bf16.gmra.mxu0 %v146
    %v226 = vpop.f32.mrf.mxu0
    %v227 = vadd.f32 %v94, %v226
    %v228 = vpop.f32.mrf.mxu0
    %v229 = vadd.f32 %v94, %v228
    %230 = vmatmul.bf16.gmra.mxu0 %v149
    %v231 = vpop.f32.mrf.mxu0
    %v232 = vadd.f32 %v94, %v231
    %v233 = vpop.f32.mrf.mxu0
    %v234 = vadd.f32 %v94, %v233
    %235 = vmatmul.bf16.gmra.mxu0 %v152
    %v236 = vpop.f32.mrf.mxu0
    %v237 = vadd.f32 %v94, %v236
    %v238 = vpop.f32.mrf.mxu0
    %v239 = vadd.f32 %v94, %v238
    %240 = vmatmul.bf16.gmra.mxu0 %v155
    %v241 = vpop.f32.mrf.mxu0
    %v242 = vadd.f32 %v94, %v241
    %v243 = vpop.f32.mrf.mxu0
    %v244 = vadd.f32 %v94, %v243
    %245 = vdwg.mxu0
    %v246 = vpack.c.bf16 %v169, %v167
    %v247 = vpack.c.bf16 %v174, %v172
    %v248 = vpack.c.bf16 %v179, %v177
    %v249 = vpack.c.bf16 %v184, %v182
    %v250 = vpack.c.bf16 %v189, %v187
    %v251 = vpack.c.bf16 %v194, %v192
    %v252 = vpack.c.bf16 %v199, %v197
    %v253 = vpack.c.bf16 %v204, %v202
    %v254 = vpack.c.bf16 %v209, %v207
    %v255 = vpack.c.bf16 %v214, %v212
    %v256 = vpack.c.bf16 %v219, %v217
    %v257 = vpack.c.bf16 %v224, %v222
    %v258 = vpack.c.bf16 %v229, %v227
    %v259 = vpack.c.bf16 %v234, %v232
    %v260 = vpack.c.bf16 %v239, %v237
    %v261 = vpack.c.bf16 %v244, %v242
    %v262 = vld [vmem:[%s4] sm:$0xf]
    %v263 = vld [vmem:[%s4 + $0x4] sm:$0xf]
    %v264 = vld [vmem:[%s4 + $0x8] sm:$0xf]
    %v265 = vld [vmem:[%s4 + $0xc] sm:$0xf]
    %v266 = vld [vmem:[%s4 + $0x10] sm:$0xf]
    %v267 = vld [vmem:[%s4 + $0x14] sm:$0xf]
    %v268 = vld [vmem:[%s4 + $0x18] sm:$0xf]
    %v269 = vld [vmem:[%s4 + $0x1c] sm:$0xf]
    %v270 = vld [vmem:[%s4 + $0x20] sm:$0xf]
    %v271 = vld [vmem:[%s4 + $0x24] sm:$0xf]
    %v272 = vld [vmem:[%s4 + $0x28] sm:$0xf]
    %v273 = vld [vmem:[%s4 + $0x2c] sm:$0xf]
    %v274 = vld [vmem:[%s4 + $0x30] sm:$0xf]
    %v275 = vld [vmem:[%s4 + $0x34] sm:$0xf]
    %v276 = vld [vmem:[%s4 + $0x38] sm:$0xf]
    %v277 = vld [vmem:[%s4 + $0x3c] sm:$0xf]
    %v278 = vld [vmem:[%s5] sm:$0x1]
    %v295 = vunpack.c.l.b16 %v262
    %v296 = vunpack.c.l.b16 %v263
    %v297 = vunpack.c.l.b16 %v264
    %v298 = vunpack.c.l.b16 %v265
    %v299 = vunpack.c.l.b16 %v266
    %v300 = vunpack.c.l.b16 %v267
    %v301 = vunpack.c.l.b16 %v268
    %v302 = vunpack.c.l.b16 %v269
    %v303 = vunpack.c.l.b16 %v270
    %v304 = vunpack.c.l.b16 %v271
    %v305 = vunpack.c.l.b16 %v272
    %v306 = vunpack.c.l.b16 %v273
    %v307 = vunpack.c.l.b16 %v274
    %v308 = vunpack.c.l.b16 %v275
    %v309 = vunpack.c.l.b16 %v276
    %v310 = vunpack.c.l.b16 %v277
    %v311 = vpack.c.b16 %v296, %v295
    %v312 = vpack.c.b16 %v298, %v297
    %v313 = vpack.c.b16 %v300, %v299
    %v314 = vpack.c.b16 %v302, %v301
    %v315 = vpack.c.b16 %v304, %v303
    %v316 = vpack.c.b16 %v306, %v305
    %v317 = vpack.c.b16 %v308, %v307
    %v318 = vpack.c.b16 %v310, %v309
    %327 = vmatpush.bf16.msra.mxu0 %v318
    %328 = vmatpush.bf16.msra.mxu0 %v317
    %329 = vmatpush.bf16.msra.mxu0 %v316
    %330 = vmatpush.bf16.msra.mxu0 %v315
    %331 = vmatpush.bf16.msra.mxu0 %v314
    %332 = vmatpush.bf16.msra.mxu0 %v313
    %333 = vmatpush.bf16.msra.mxu0 %v312
    %334 = vmatpush.bf16.msra.mxu0 %v311
    %335 = vmatmul.bf16.gmra.mxu0 %v246
    %v336 = vpop.f32.mrf.mxu0
    %v337 = vadd.f32 0.0, %v336
    %v338 = vpop.f32.mrf.mxu0
    %v339 = vadd.f32 0.0, %v338
    %340 = vmatmul.bf16.gmra.mxu0 %v247
    %v341 = vpop.f32.mrf.mxu0
    %v342 = vadd.f32 0.0, %v341
    %v343 = vpop.f32.mrf.mxu0
    %v344 = vadd.f32 0.0, %v343
    %345 = vmatmul.bf16.gmra.mxu0 %v248
    %v346 = vpop.f32.mrf.mxu0
    %v347 = vadd.f32 0.0, %v346
    %v348 = vpop.f32.mrf.mxu0
    %v349 = vadd.f32 0.0, %v348
    %350 = vmatmul.bf16.gmra.mxu0 %v249
    %v351 = vpop.f32.mrf.mxu0
    %v352 = vadd.f32 0.0, %v351
    %v353 = vpop.f32.mrf.mxu0
    %v354 = vadd.f32 0.0, %v353
    %355 = vmatmul.bf16.gmra.mxu0 %v250
    %v356 = vpop.f32.mrf.mxu0
    %v357 = vadd.f32 0.0, %v356
    %v358 = vpop.f32.mrf.mxu0
    %v359 = vadd.f32 0.0, %v358
    %360 = vmatmul.bf16.gmra.mxu0 %v251
    %v361 = vpop.f32.mrf.mxu0
    %v362 = vadd.f32 0.0, %v361
    %v363 = vpop.f32.mrf.mxu0
    %v364 = vadd.f32 0.0, %v363
    %365 = vmatmul.bf16.gmra.mxu0 %v252
    %v366 = vpop.f32.mrf.mxu0
    %v367 = vadd.f32 0.0, %v366
    %v368 = vpop.f32.mrf.mxu0
    %v369 = vadd.f32 0.0, %v368
    %370 = vmatmul.bf16.gmra.mxu0 %v253
    %v371 = vpop.f32.mrf.mxu0
    %v372 = vadd.f32 0.0, %v371
    %v373 = vpop.f32.mrf.mxu0
    %v374 = vadd.f32 0.0, %v373
    %375 = vmatmul.bf16.gmra.mxu0 %v254
    %v376 = vpop.f32.mrf.mxu0
    %v377 = vadd.f32 0.0, %v376
    %v378 = vpop.f32.mrf.mxu0
    %v379 = vadd.f32 0.0, %v378
    %380 = vmatmul.bf16.gmra.mxu0 %v255
    %v381 = vpop.f32.mrf.mxu0
    %v382 = vadd.f32 0.0, %v381
    %v383 = vpop.f32.mrf.mxu0
    %v384 = vadd.f32 0.0, %v383
    %385 = vmatmul.bf16.gmra.mxu0 %v256
    %v386 = vpop.f32.mrf.mxu0
    %v387 = vadd.f32 0.0, %v386
    %v388 = vpop.f32.mrf.mxu0
    %v389 = vadd.f32 0.0, %v388
    %390 = vmatmul.bf16.gmra.mxu0 %v257
    %v391 = vpop.f32.mrf.mxu0
    %v392 = vadd.f32 0.0, %v391
    %v393 = vpop.f32.mrf.mxu0
    %v394 = vadd.f32 0.0, %v393
    %395 = vmatmul.bf16.gmra.mxu0 %v258
    %v396 = vpop.f32.mrf.mxu0
    %v397 = vadd.f32 0.0, %v396
    %v398 = vpop.f32.mrf.mxu0
    %v399 = vadd.f32 0.0, %v398
    %400 = vmatmul.bf16.gmra.mxu0 %v259
    %v401 = vpop.f32.mrf.mxu0
    %v402 = vadd.f32 0.0, %v401
    %v403 = vpop.f32.mrf.mxu0
    %v404 = vadd.f32 0.0, %v403
    %405 = vmatmul.bf16.gmra.mxu0 %v260
    %v406 = vpop.f32.mrf.mxu0
    %v407 = vadd.f32 0.0, %v406
    %v408 = vpop.f32.mrf.mxu0
    %v409 = vadd.f32 0.0, %v408
    %410 = vmatmul.bf16.gmra.mxu0 %v261
    %v411 = vpop.f32.mrf.mxu0
    %v412 = vadd.f32 0.0, %v411
    %v413 = vpop.f32.mrf.mxu0
    %v414 = vadd.f32 0.0, %v413
    %415 = vdwg.mxu0
    %v416 = vld [vmem:[#allocation2] sm:$0xff]
    %v417 = vld [vmem:[#allocation2 + $0x8] sm:$0xff]
    %v418 = vld [vmem:[#allocation2 + $0x10] sm:$0xff]
    %v419 = vld [vmem:[#allocation2 + $0x18] sm:$0xff]
    %v420 = vld [vmem:[#allocation2 + $0x20] sm:$0xff]
    %v421 = vld [vmem:[#allocation2 + $0x28] sm:$0xff]
    %v422 = vld [vmem:[#allocation2 + $0x30] sm:$0xff]
    %v423 = vld [vmem:[#allocation2 + $0x38] sm:$0xff]
    %v424 = vld [vmem:[#allocation2 + $0x40] sm:$0xff]
    %v425 = vld [vmem:[#allocation2 + $0x48] sm:$0xff]
    %v426 = vld [vmem:[#allocation2 + $0x50] sm:$0xff]
    %v427 = vld [vmem:[#allocation2 + $0x58] sm:$0xff]
    %v428 = vld [vmem:[#allocation2 + $0x60] sm:$0xff]
    %v429 = vld [vmem:[#allocation2 + $0x68] sm:$0xff]
    %v430 = vld [vmem:[#allocation2 + $0x70] sm:$0xff]
    %v431 = vld [vmem:[#allocation2 + $0x78] sm:$0xff]
    %v432 = vld [vmem:[#allocation2 + $0x80] sm:$0xff]
    %v433 = vld [vmem:[#allocation2 + $0x88] sm:$0xff]
    %v434 = vld [vmem:[#allocation2 + $0x90] sm:$0xff]
    %v435 = vld [vmem:[#allocation2 + $0x98] sm:$0xff]
    %v436 = vld [vmem:[#allocation2 + $0xa0] sm:$0xff]
    %v437 = vld [vmem:[#allocation2 + $0xa8] sm:$0xff]
    %v438 = vld [vmem:[#allocation2 + $0xb0] sm:$0xff]
    %v439 = vld [vmem:[#allocation2 + $0xb8] sm:$0xff]
    %v440 = vld [vmem:[#allocation2 + $0xc0] sm:$0xff]
    %v441 = vld [vmem:[#allocation2 + $0xc8] sm:$0xff]
    %v442 = vld [vmem:[#allocation2 + $0xd0] sm:$0xff]
    %v443 = vld [vmem:[#allocation2 + $0xd8] sm:$0xff]
    %v444 = vld [vmem:[#allocation2 + $0xe0] sm:$0xff]
    %v445 = vld [vmem:[#allocation2 + $0xe8] sm:$0xff]
    %v446 = vld [vmem:[#allocation2 + $0xf0] sm:$0xff]
    %v447 = vld [vmem:[#allocation2 + $0xf8] sm:$0xff]
    %v448 = vld [vmem:[#allocation2 + $0x100] sm:$0xff]
    %v449 = vld [vmem:[#allocation2 + $0x108] sm:$0xff]
    %v450 = vld [vmem:[#allocation2 + $0x110] sm:$0xff]
    %v451 = vld [vmem:[#allocation2 + $0x118] sm:$0xff]
    %v452 = vld [vmem:[#allocation2 + $0x120] sm:$0xff]
    %v453 = vld [vmem:[#allocation2 + $0x128] sm:$0xff]
    %v454 = vld [vmem:[#allocation2 + $0x130] sm:$0xff]
    %v455 = vld [vmem:[#allocation2 + $0x138] sm:$0xff]
    %v456 = vld [vmem:[#allocation2 + $0x140] sm:$0xff]
    %v457 = vld [vmem:[#allocation2 + $0x148] sm:$0xff]
    %v458 = vld [vmem:[#allocation2 + $0x150] sm:$0xff]
    %v459 = vld [vmem:[#allocation2 + $0x158] sm:$0xff]
    %v460 = vld [vmem:[#allocation2 + $0x160] sm:$0xff]
    %v461 = vld [vmem:[#allocation2 + $0x168] sm:$0xff]
    %v462 = vld [vmem:[#allocation2 + $0x170] sm:$0xff]
    %v463 = vld [vmem:[#allocation2 + $0x178] sm:$0xff]
    %v464 = vld [vmem:[#allocation2 + $0x180] sm:$0xff]
    %v465 = vld [vmem:[#allocation2 + $0x188] sm:$0xff]
    %v466 = vld [vmem:[#allocation2 + $0x190] sm:$0xff]
    %v467 = vld [vmem:[#allocation2 + $0x198] sm:$0xff]
    %v468 = vld [vmem:[#allocation2 + $0x1a0] sm:$0xff]
    %v469 = vld [vmem:[#allocation2 + $0x1a8] sm:$0xff]
    %v470 = vld [vmem:[#allocation2 + $0x1b0] sm:$0xff]
    %v471 = vld [vmem:[#allocation2 + $0x1b8] sm:$0xff]
    %v472 = vld [vmem:[#allocation2 + $0x1c0] sm:$0xff]
    %v473 = vld [vmem:[#allocation2 + $0x1c8] sm:$0xff]
    %v474 = vld [vmem:[#allocation2 + $0x1d0] sm:$0xff]
    %v475 = vld [vmem:[#allocation2 + $0x1d8] sm:$0xff]
    %v476 = vld [vmem:[#allocation2 + $0x1e0] sm:$0xff]
    %v477 = vld [vmem:[#allocation2 + $0x1e8] sm:$0xff]
    %v478 = vld [vmem:[#allocation2 + $0x1f0] sm:$0xff]
    %v479 = vld [vmem:[#allocation2 + $0x1f8] sm:$0xff]
    %v481 = vperm.slane %v278, 0
    %483 = vmatpush.msra.mxu0 %v374
    %484 = vmatpush.msra.mxu0 %v372
    %485 = vmatpush.msra.mxu0 %v369
    %486 = vmatpush.msra.mxu0 %v367
    %487 = vmatpush.msra.mxu0 %v364
    %488 = vmatpush.msra.mxu0 %v362
    %489 = vmatpush.msra.mxu0 %v359
    %490 = vmatpush.msra.mxu0 %v357
    %491 = vmatpush.msra.mxu0 %v354
    %492 = vmatpush.msra.mxu0 %v352
    %493 = vmatpush.msra.mxu0 %v349
    %494 = vmatpush.msra.mxu0 %v347
    %495 = vmatpush.msra.mxu0 %v344
    %496 = vmatpush.msra.mxu0 %v342
    %497 = vmatpush.msra.mxu0 %v339
    %498 = vmatpush.msra.mxu0 %v337
    %499 = vmatmul.f32.gmra.mxu0 %v416
    %v500 = vpop.f32.mrf.mxu0
    %v501 = vadd.f32 %v481, %v500
    %502 = vmatmul.f32.gmra.mxu0 %v418
    %v503 = vpop.f32.mrf.mxu0
    %v504 = vadd.f32 %v481, %v503
    %505 = vmatmul.f32.gmra.mxu0 %v420
    %v506 = vpop.f32.mrf.mxu0
    %v507 = vadd.f32 %v481, %v506
    %508 = vmatmul.f32.gmra.mxu0 %v422
    %v509 = vpop.f32.mrf.mxu0
    %v510 = vadd.f32 %v481, %v509
    %511 = vmatmul.f32.gmra.mxu0 %v424
    %v512 = vpop.f32.mrf.mxu0
    %v513 = vadd.f32 %v481, %v512
    %514 = vmatmul.f32.gmra.mxu0 %v426
    %v515 = vpop.f32.mrf.mxu0
    %v516 = vadd.f32 %v481, %v515
    %517 = vmatmul.f32.gmra.mxu0 %v428
    %v518 = vpop.f32.mrf.mxu0
    %v519 = vadd.f32 %v481, %v518
    %520 = vmatmul.f32.gmra.mxu0 %v430
    %v521 = vpop.f32.mrf.mxu0
    %v522 = vadd.f32 %v481, %v521
    %523 = vmatmul.f32.gmra.mxu0 %v432
    %v524 = vpop.f32.mrf.mxu0
    %v525 = vadd.f32 %v481, %v524
    %526 = vmatmul.f32.gmra.mxu0 %v434
    %v527 = vpop.f32.mrf.mxu0
    %v528 = vadd.f32 %v481, %v527
    %529 = vmatmul.f32.gmra.mxu0 %v436
    %v530 = vpop.f32.mrf.mxu0
    %v531 = vadd.f32 %v481, %v530
    %532 = vmatmul.f32.gmra.mxu0 %v438
    %v533 = vpop.f32.mrf.mxu0
    %v534 = vadd.f32 %v481, %v533
    %535 = vmatmul.f32.gmra.mxu0 %v440
    %v536 = vpop.f32.mrf.mxu0
    %v537 = vadd.f32 %v481, %v536
    %538 = vmatmul.f32.gmra.mxu0 %v442
    %v539 = vpop.f32.mrf.mxu0
    %v540 = vadd.f32 %v481, %v539
    %541 = vmatmul.f32.gmra.mxu0 %v444
    %v542 = vpop.f32.mrf.mxu0
    %v543 = vadd.f32 %v481, %v542
    %544 = vmatmul.f32.gmra.mxu0 %v446
    %v545 = vpop.f32.mrf.mxu0
    %v546 = vadd.f32 %v481, %v545
    %547 = vmatmul.f32.gmra.mxu0 %v448
    %v548 = vpop.f32.mrf.mxu0
    %v549 = vadd.f32 %v481, %v548
    %550 = vmatmul.f32.gmra.mxu0 %v450
    %v551 = vpop.f32.mrf.mxu0
    %v552 = vadd.f32 %v481, %v551
    %553 = vmatmul.f32.gmra.mxu0 %v452
    %v554 = vpop.f32.mrf.mxu0
    %v555 = vadd.f32 %v481, %v554
    %556 = vmatmul.f32.gmra.mxu0 %v454
    %v557 = vpop.f32.mrf.mxu0
    %v558 = vadd.f32 %v481, %v557
    %559 = vmatmul.f32.gmra.mxu0 %v456
    %v560 = vpop.f32.mrf.mxu0
    %v561 = vadd.f32 %v481, %v560
    %562 = vmatmul.f32.gmra.mxu0 %v458
    %v563 = vpop.f32.mrf.mxu0
    %v564 = vadd.f32 %v481, %v563
    %565 = vmatmul.f32.gmra.mxu0 %v460
    %v566 = vpop.f32.mrf.mxu0
    %v567 = vadd.f32 %v481, %v566
    %568 = vmatmul.f32.gmra.mxu0 %v462
    %v569 = vpop.f32.mrf.mxu0
    %v570 = vadd.f32 %v481, %v569
    %571 = vmatmul.f32.gmra.mxu0 %v464
    %v572 = vpop.f32.mrf.mxu0
    %v573 = vadd.f32 %v481, %v572
    %574 = vmatmul.f32.gmra.mxu0 %v466
    %v575 = vpop.f32.mrf.mxu0
    %v576 = vadd.f32 %v481, %v575
    %577 = vmatmul.f32.gmra.mxu0 %v468
    %v578 = vpop.f32.mrf.mxu0
    %v579 = vadd.f32 %v481, %v578
    %580 = vmatmul.f32.gmra.mxu0 %v470
    %v581 = vpop.f32.mrf.mxu0
    %v582 = vadd.f32 %v481, %v581
    %583 = vmatmul.f32.gmra.mxu0 %v472
    %v584 = vpop.f32.mrf.mxu0
    %v585 = vadd.f32 %v481, %v584
    %586 = vmatmul.f32.gmra.mxu0 %v474
    %v587 = vpop.f32.mrf.mxu0
    %v588 = vadd.f32 %v481, %v587
    %589 = vmatmul.f32.gmra.mxu0 %v476
    %v590 = vpop.f32.mrf.mxu0
    %v591 = vadd.f32 %v481, %v590
    %592 = vmatmul.f32.gmra.mxu0 %v478
    %v593 = vpop.f32.mrf.mxu0
    %v594 = vadd.f32 %v481, %v593
    %595 = vdwg.mxu0
    %596 = vmatpush.msra.mxu0 %v414
    %597 = vmatpush.msra.mxu0 %v412
    %598 = vmatpush.msra.mxu0 %v409
    %599 = vmatpush.msra.mxu0 %v407
    %600 = vmatpush.msra.mxu0 %v404
    %601 = vmatpush.msra.mxu0 %v402
    %602 = vmatpush.msra.mxu0 %v399
    %603 = vmatpush.msra.mxu0 %v397
    %604 = vmatpush.msra.mxu0 %v394
    %605 = vmatpush.msra.mxu0 %v392
    %606 = vmatpush.msra.mxu0 %v389
    %607 = vmatpush.msra.mxu0 %v387
    %608 = vmatpush.msra.mxu0 %v384
    %609 = vmatpush.msra.mxu0 %v382
    %610 = vmatpush.msra.mxu0 %v379
    %611 = vmatpush.msra.mxu0 %v377
    %612 = vmatmul.f32.gmra.mxu0 %v417
    %v613 = vpop.f32.mrf.mxu0
    %v614 = vadd.f32 %v501, %v613
    %615 = vmatmul.f32.gmra.mxu0 %v419
    %v616 = vpop.f32.mrf.mxu0
    %v617 = vadd.f32 %v504, %v616
    %618 = vmatmul.f32.gmra.mxu0 %v421
    %v619 = vpop.f32.mrf.mxu0
    %v620 = vadd.f32 %v507, %v619
    %621 = vmatmul.f32.gmra.mxu0 %v423
    %v622 = vpop.f32.mrf.mxu0
    %v623 = vadd.f32 %v510, %v622
    %624 = vmatmul.f32.gmra.mxu0 %v425
    %v625 = vpop.f32.mrf.mxu0
    %v626 = vadd.f32 %v513, %v625
    %627 = vmatmul.f32.gmra.mxu0 %v427
    %v628 = vpop.f32.mrf.mxu0
    %v629 = vadd.f32 %v516, %v628
    %630 = vmatmul.f32.gmra.mxu0 %v429
    %v631 = vpop.f32.mrf.mxu0
    %v632 = vadd.f32 %v519, %v631
    %633 = vmatmul.f32.gmra.mxu0 %v431
    %v634 = vpop.f32.mrf.mxu0
    %v635 = vadd.f32 %v522, %v634
    %636 = vmatmul.f32.gmra.mxu0 %v433
    %v637 = vpop.f32.mrf.mxu0
    %v638 = vadd.f32 %v525, %v637
    %639 = vmatmul.f32.gmra.mxu0 %v435
    %v640 = vpop.f32.mrf.mxu0
    %v641 = vadd.f32 %v528, %v640
    %642 = vmatmul.f32.gmra.mxu0 %v437
    %v643 = vpop.f32.mrf.mxu0
    %v644 = vadd.f32 %v531, %v643
    %645 = vmatmul.f32.gmra.mxu0 %v439
    %v646 = vpop.f32.mrf.mxu0
    %v647 = vadd.f32 %v534, %v646
    %648 = vmatmul.f32.gmra.mxu0 %v441
    %v649 = vpop.f32.mrf.mxu0
    %v650 = vadd.f32 %v537, %v649
    %651 = vmatmul.f32.gmra.mxu0 %v443
    %v652 = vpop.f32.mrf.mxu0
    %v653 = vadd.f32 %v540, %v652
    %654 = vmatmul.f32.gmra.mxu0 %v445
    %v655 = vpop.f32.mrf.mxu0
    %v656 = vadd.f32 %v543, %v655
    %657 = vmatmul.f32.gmra.mxu0 %v447
    %v658 = vpop.f32.mrf.mxu0
    %v659 = vadd.f32 %v546, %v658
    %660 = vmatmul.f32.gmra.mxu0 %v449
    %v661 = vpop.f32.mrf.mxu0
    %v662 = vadd.f32 %v549, %v661
    %663 = vmatmul.f32.gmra.mxu0 %v451
    %v664 = vpop.f32.mrf.mxu0
    %v665 = vadd.f32 %v552, %v664
    %666 = vmatmul.f32.gmra.mxu0 %v453
    %v667 = vpop.f32.mrf.mxu0
    %v668 = vadd.f32 %v555, %v667
    %669 = vmatmul.f32.gmra.mxu0 %v455
    %v670 = vpop.f32.mrf.mxu0
    %v671 = vadd.f32 %v558, %v670
    %672 = vmatmul.f32.gmra.mxu0 %v457
    %v673 = vpop.f32.mrf.mxu0
    %v674 = vadd.f32 %v561, %v673
    %675 = vmatmul.f32.gmra.mxu0 %v459
    %v676 = vpop.f32.mrf.mxu0
    %v677 = vadd.f32 %v564, %v676
    %678 = vmatmul.f32.gmra.mxu0 %v461
    %v679 = vpop.f32.mrf.mxu0
    %v680 = vadd.f32 %v567, %v679
    %681 = vmatmul.f32.gmra.mxu0 %v463
    %v682 = vpop.f32.mrf.mxu0
    %v683 = vadd.f32 %v570, %v682
    %684 = vmatmul.f32.gmra.mxu0 %v465
    %v685 = vpop.f32.mrf.mxu0
    %v686 = vadd.f32 %v573, %v685
    %687 = vmatmul.f32.gmra.mxu0 %v467
    %v688 = vpop.f32.mrf.mxu0
    %v689 = vadd.f32 %v576, %v688
    %690 = vmatmul.f32.gmra.mxu0 %v469
    %v691 = vpop.f32.mrf.mxu0
    %v692 = vadd.f32 %v579, %v691
    %693 = vmatmul.f32.gmra.mxu0 %v471
    %v694 = vpop.f32.mrf.mxu0
    %v695 = vadd.f32 %v582, %v694
    %696 = vmatmul.f32.gmra.mxu0 %v473
    %v697 = vpop.f32.mrf.mxu0
    %v698 = vadd.f32 %v585, %v697
    %699 = vmatmul.f32.gmra.mxu0 %v475
    %v700 = vpop.f32.mrf.mxu0
    %v701 = vadd.f32 %v588, %v700
    %702 = vmatmul.f32.gmra.mxu0 %v477
    %v703 = vpop.f32.mrf.mxu0
    %v704 = vadd.f32 %v591, %v703
    %705 = vmatmul.f32.gmra.mxu0 %v479
    %v706 = vpop.f32.mrf.mxu0
    %v707 = vadd.f32 %v594, %v706
    %708 = vdwg.mxu0
    %v709 = vmax.f32 %v614, 0.0
    %v710 = vmax.f32 %v617, 0.0
    %v711 = vmax.f32 %v620, 0.0
    %v712 = vmax.f32 %v623, 0.0
    %v713 = vmax.f32 %v626, 0.0
    %v714 = vmax.f32 %v629, 0.0
    %v715 = vmax.f32 %v632, 0.0
    %v716 = vmax.f32 %v635, 0.0
    %v717 = vmax.f32 %v638, 0.0
    %v718 = vmax.f32 %v641, 0.0
    %v719 = vmax.f32 %v644, 0.0
    %v720 = vmax.f32 %v647, 0.0
    %v721 = vmax.f32 %v650, 0.0
    %v722 = vmax.f32 %v653, 0.0
    %v723 = vmax.f32 %v656, 0.0
    %v724 = vmax.f32 %v659, 0.0
    %v725 = vmax.f32 %v662, 0.0
    %v726 = vmax.f32 %v665, 0.0
    %v727 = vmax.f32 %v668, 0.0
    %v728 = vmax.f32 %v671, 0.0
    %v729 = vmax.f32 %v674, 0.0
    %v730 = vmax.f32 %v677, 0.0
    %v731 = vmax.f32 %v680, 0.0
    %v732 = vmax.f32 %v683, 0.0
    %v733 = vmax.f32 %v686, 0.0
    %v734 = vmax.f32 %v689, 0.0
    %v735 = vmax.f32 %v692, 0.0
    %v736 = vmax.f32 %v695, 0.0
    %v737 = vmax.f32 %v698, 0.0
    %v738 = vmax.f32 %v701, 0.0
    %v739 = vmax.f32 %v704, 0.0
    %v740 = vmax.f32 %v707, 0.0
    %v741 = vpack.c.bf16 %v710, %v709
    %v742 = vpack.c.bf16 %v712, %v711
    %v743 = vpack.c.bf16 %v714, %v713
    %v744 = vpack.c.bf16 %v716, %v715
    %v745 = vpack.c.bf16 %v718, %v717
    %v746 = vpack.c.bf16 %v720, %v719
    %v747 = vpack.c.bf16 %v722, %v721
    %v748 = vpack.c.bf16 %v724, %v723
    %v749 = vpack.c.bf16 %v726, %v725
    %v750 = vpack.c.bf16 %v728, %v727
    %v751 = vpack.c.bf16 %v730, %v729
    %v752 = vpack.c.bf16 %v732, %v731
    %v753 = vpack.c.bf16 %v734, %v733
    %v754 = vpack.c.bf16 %v736, %v735
    %v755 = vpack.c.bf16 %v738, %v737
    %v756 = vpack.c.bf16 %v740, %v739
    %s757 = scalar_lea.vmem %s4, 64
    %v758 = vld [vmem:[%s757] sm:$0xf]
    %v759 = vld [vmem:[%s757 + $0x4] sm:$0xf]
    %v760 = vld [vmem:[%s757 + $0x8] sm:$0xf]
    %v761 = vld [vmem:[%s757 + $0xc] sm:$0xf]
    %v762 = vld [vmem:[%s757 + $0x10] sm:$0xf]
    %v763 = vld [vmem:[%s757 + $0x14] sm:$0xf]
    %v764 = vld [vmem:[%s757 + $0x18] sm:$0xf]
    %v765 = vld [vmem:[%s757 + $0x1c] sm:$0xf]
    %v766 = vld [vmem:[%s757 + $0x20] sm:$0xf]
    %v767 = vld [vmem:[%s757 + $0x24] sm:$0xf]
    %v768 = vld [vmem:[%s757 + $0x28] sm:$0xf]
    %v769 = vld [vmem:[%s757 + $0x2c] sm:$0xf]
    %v770 = vld [vmem:[%s757 + $0x30] sm:$0xf]
    %v771 = vld [vmem:[%s757 + $0x34] sm:$0xf]
    %v772 = vld [vmem:[%s757 + $0x38] sm:$0xf]
    %v773 = vld [vmem:[%s757 + $0x3c] sm:$0xf]
    %s774 = scalar_lea.vmem %s5, 1
    %v775 = vld [vmem:[%s774] sm:$0x1]
    %v792 = vunpack.c.l.b16 %v758
    %v793 = vunpack.c.l.b16 %v759
    %v794 = vunpack.c.l.b16 %v760
    %v795 = vunpack.c.l.b16 %v761
    %v796 = vunpack.c.l.b16 %v762
    %v797 = vunpack.c.l.b16 %v763
    %v798 = vunpack.c.l.b16 %v764
    %v799 = vunpack.c.l.b16 %v765
    %v800 = vunpack.c.l.b16 %v766
    %v801 = vunpack.c.l.b16 %v767
    %v802 = vunpack.c.l.b16 %v768
    %v803 = vunpack.c.l.b16 %v769
    %v804 = vunpack.c.l.b16 %v770
    %v805 = vunpack.c.l.b16 %v771
    %v806 = vunpack.c.l.b16 %v772
    %v807 = vunpack.c.l.b16 %v773
    %v808 = vpack.c.b16 %v793, %v792
    %v809 = vpack.c.b16 %v795, %v794
    %v810 = vpack.c.b16 %v797, %v796
    %v811 = vpack.c.b16 %v799, %v798
    %v812 = vpack.c.b16 %v801, %v800
    %v813 = vpack.c.b16 %v803, %v802
    %v814 = vpack.c.b16 %v805, %v804
    %v815 = vpack.c.b16 %v807, %v806
    %824 = vmatpush.bf16.msra.mxu0 %v815
    %825 = vmatpush.bf16.msra.mxu0 %v814
    %826 = vmatpush.bf16.msra.mxu0 %v813
    %827 = vmatpush.bf16.msra.mxu0 %v812
    %828 = vmatpush.bf16.msra.mxu0 %v811
    %829 = vmatpush.bf16.msra.mxu0 %v810
    %830 = vmatpush.bf16.msra.mxu0 %v809
    %831 = vmatpush.bf16.msra.mxu0 %v808
    %832 = vmatmul.bf16.gmra.mxu0 %v741
    %v833 = vpop.f32.mrf.mxu0
    %v834 = vadd.f32 0.0, %v833
    %v835 = vpop.f32.mrf.mxu0
    %v836 = vadd.f32 0.0, %v835
    %837 = vmatmul.bf16.gmra.mxu0 %v742
    %v838 = vpop.f32.mrf.mxu0
    %v839 = vadd.f32 0.0, %v838
    %v840 = vpop.f32.mrf.mxu0
    %v841 = vadd.f32 0.0, %v840
    %842 = vmatmul.bf16.gmra.mxu0 %v743
    %v843 = vpop.f32.mrf.mxu0
    %v844 = vadd.f32 0.0, %v843
    %v845 = vpop.f32.mrf.mxu0
    %v846 = vadd.f32 0.0, %v845
    %847 = vmatmul.bf16.gmra.mxu0 %v744
    %v848 = vpop.f32.mrf.mxu0
    %v849 = vadd.f32 0.0, %v848
    %v850 = vpop.f32.mrf.mxu0
    %v851 = vadd.f32 0.0, %v850
    %852 = vmatmul.bf16.gmra.mxu0 %v745
    %v853 = vpop.f32.mrf.mxu0
    %v854 = vadd.f32 0.0, %v853
    %v855 = vpop.f32.mrf.mxu0
    %v856 = vadd.f32 0.0, %v855
    %857 = vmatmul.bf16.gmra.mxu0 %v746
    %v858 = vpop.f32.mrf.mxu0
    %v859 = vadd.f32 0.0, %v858
    %v860 = vpop.f32.mrf.mxu0
    %v861 = vadd.f32 0.0, %v860
    %862 = vmatmul.bf16.gmra.mxu0 %v747
    %v863 = vpop.f32.mrf.mxu0
    %v864 = vadd.f32 0.0, %v863
    %v865 = vpop.f32.mrf.mxu0
    %v866 = vadd.f32 0.0, %v865
    %867 = vmatmul.bf16.gmra.mxu0 %v748
    %v868 = vpop.f32.mrf.mxu0
    %v869 = vadd.f32 0.0, %v868
    %v870 = vpop.f32.mrf.mxu0
    %v871 = vadd.f32 0.0, %v870
    %872 = vmatmul.bf16.gmra.mxu0 %v749
    %v873 = vpop.f32.mrf.mxu0
    %v874 = vadd.f32 0.0, %v873
    %v875 = vpop.f32.mrf.mxu0
    %v876 = vadd.f32 0.0, %v875
    %877 = vmatmul.bf16.gmra.mxu0 %v750
    %v878 = vpop.f32.mrf.mxu0
    %v879 = vadd.f32 0.0, %v878
    %v880 = vpop.f32.mrf.mxu0
    %v881 = vadd.f32 0.0, %v880
    %882 = vmatmul.bf16.gmra.mxu0 %v751
    %v883 = vpop.f32.mrf.mxu0
    %v884 = vadd.f32 0.0, %v883
    %v885 = vpop.f32.mrf.mxu0
    %v886 = vadd.f32 0.0, %v885
    %887 = vmatmul.bf16.gmra.mxu0 %v752
    %v888 = vpop.f32.mrf.mxu0
    %v889 = vadd.f32 0.0, %v888
    %v890 = vpop.f32.mrf.mxu0
    %v891 = vadd.f32 0.0, %v890
    %892 = vmatmul.bf16.gmra.mxu0 %v753
    %v893 = vpop.f32.mrf.mxu0
    %v894 = vadd.f32 0.0, %v893
    %v895 = vpop.f32.mrf.mxu0
    %v896 = vadd.f32 0.0, %v895
    %897 = vmatmul.bf16.gmra.mxu0 %v754
    %v898 = vpop.f32.mrf.mxu0
    %v899 = vadd.f32 0.0, %v898
    %v900 = vpop.f32.mrf.mxu0
    %v901 = vadd.f32 0.0, %v900
    %902 = vmatmul.bf16.gmra.mxu0 %v755
    %v903 = vpop.f32.mrf.mxu0
    %v904 = vadd.f32 0.0, %v903
    %v905 = vpop.f32.mrf.mxu0
    %v906 = vadd.f32 0.0, %v905
    %907 = vmatmul.bf16.gmra.mxu0 %v756
    %v908 = vpop.f32.mrf.mxu0
    %v909 = vadd.f32 0.0, %v908
    %v910 = vpop.f32.mrf.mxu0
    %v911 = vadd.f32 0.0, %v910
    %912 = vdwg.mxu0
    %v914 = vperm.slane %v775, 0
    %916 = vmatpush.msra.mxu0 %v871
    %917 = vmatpush.msra.mxu0 %v869
    %918 = vmatpush.msra.mxu0 %v866
    %919 = vmatpush.msra.mxu0 %v864
    %920 = vmatpush.msra.mxu0 %v861
    %921 = vmatpush.msra.mxu0 %v859
    %922 = vmatpush.msra.mxu0 %v856
    %923 = vmatpush.msra.mxu0 %v854
    %924 = vmatpush.msra.mxu0 %v851
    %925 = vmatpush.msra.mxu0 %v849
    %926 = vmatpush.msra.mxu0 %v846
    %927 = vmatpush.msra.mxu0 %v844
    %928 = vmatpush.msra.mxu0 %v841
    %929 = vmatpush.msra.mxu0 %v839
    %930 = vmatpush.msra.mxu0 %v836
    %931 = vmatpush.msra.mxu0 %v834
    %932 = vmatmul.f32.gmra.mxu0 %v416
    %v933 = vpop.f32.mrf.mxu0
    %v934 = vadd.f32 %v914, %v933
    %935 = vmatmul.f32.gmra.mxu0 %v418
    %v936 = vpop.f32.mrf.mxu0
    %v937 = vadd.f32 %v914, %v936
    %938 = vmatmul.f32.gmra.mxu0 %v420
    %v939 = vpop.f32.mrf.mxu0
    %v940 = vadd.f32 %v914, %v939
    %941 = vmatmul.f32.gmra.mxu0 %v422
    %v942 = vpop.f32.mrf.mxu0
    %v943 = vadd.f32 %v914, %v942
    %944 = vmatmul.f32.gmra.mxu0 %v424
    %v945 = vpop.f32.mrf.mxu0
    %v946 = vadd.f32 %v914, %v945
    %947 = vmatmul.f32.gmra.mxu0 %v426
    %v948 = vpop.f32.mrf.mxu0
    %v949 = vadd.f32 %v914, %v948
    %950 = vmatmul.f32.gmra.mxu0 %v428
    %v951 = vpop.f32.mrf.mxu0
    %v952 = vadd.f32 %v914, %v951
    %953 = vmatmul.f32.gmra.mxu0 %v430
    %v954 = vpop.f32.mrf.mxu0
    %v955 = vadd.f32 %v914, %v954
    %956 = vmatmul.f32.gmra.mxu0 %v432
    %v957 = vpop.f32.mrf.mxu0
    %v958 = vadd.f32 %v914, %v957
    %959 = vmatmul.f32.gmra.mxu0 %v434
    %v960 = vpop.f32.mrf.mxu0
    %v961 = vadd.f32 %v914, %v960
    %962 = vmatmul.f32.gmra.mxu0 %v436
    %v963 = vpop.f32.mrf.mxu0
    %v964 = vadd.f32 %v914, %v963
    %965 = vmatmul.f32.gmra.mxu0 %v438
    %v966 = vpop.f32.mrf.mxu0
    %v967 = vadd.f32 %v914, %v966
    %968 = vmatmul.f32.gmra.mxu0 %v440
    %v969 = vpop.f32.mrf.mxu0
    %v970 = vadd.f32 %v914, %v969
    %971 = vmatmul.f32.gmra.mxu0 %v442
    %v972 = vpop.f32.mrf.mxu0
    %v973 = vadd.f32 %v914, %v972
    %974 = vmatmul.f32.gmra.mxu0 %v444
    %v975 = vpop.f32.mrf.mxu0
    %v976 = vadd.f32 %v914, %v975
    %977 = vmatmul.f32.gmra.mxu0 %v446
    %v978 = vpop.f32.mrf.mxu0
    %v979 = vadd.f32 %v914, %v978
    %980 = vmatmul.f32.gmra.mxu0 %v448
    %v981 = vpop.f32.mrf.mxu0
    %v982 = vadd.f32 %v914, %v981
    %983 = vmatmul.f32.gmra.mxu0 %v450
    %v984 = vpop.f32.mrf.mxu0
    %v985 = vadd.f32 %v914, %v984
    %986 = vmatmul.f32.gmra.mxu0 %v452
    %v987 = vpop.f32.mrf.mxu0
    %v988 = vadd.f32 %v914, %v987
    %989 = vmatmul.f32.gmra.mxu0 %v454
    %v990 = vpop.f32.mrf.mxu0
    %v991 = vadd.f32 %v914, %v990
    %992 = vmatmul.f32.gmra.mxu0 %v456
    %v993 = vpop.f32.mrf.mxu0
    %v994 = vadd.f32 %v914, %v993
    %995 = vmatmul.f32.gmra.mxu0 %v458
    %v996 = vpop.f32.mrf.mxu0
    %v997 = vadd.f32 %v914, %v996
    %998 = vmatmul.f32.gmra.mxu0 %v460
    %v999 = vpop.f32.mrf.mxu0
    %v1000 = vadd.f32 %v914, %v999
    %1001 = vmatmul.f32.gmra.mxu0 %v462
    %v1002 = vpop.f32.mrf.mxu0
    %v1003 = vadd.f32 %v914, %v1002
    %1004 = vmatmul.f32.gmra.mxu0 %v464
    %v1005 = vpop.f32.mrf.mxu0
    %v1006 = vadd.f32 %v914, %v1005
    %1007 = vmatmul.f32.gmra.mxu0 %v466
    %v1008 = vpop.f32.mrf.mxu0
    %v1009 = vadd.f32 %v914, %v1008
    %1010 = vmatmul.f32.gmra.mxu0 %v468
    %v1011 = vpop.f32.mrf.mxu0
    %v1012 = vadd.f32 %v914, %v1011
    %1013 = vmatmul.f32.gmra.mxu0 %v470
    %v1014 = vpop.f32.mrf.mxu0
    %v1015 = vadd.f32 %v914, %v1014
    %1016 = vmatmul.f32.gmra.mxu0 %v472
    %v1017 = vpop.f32.mrf.mxu0
    %v1018 = vadd.f32 %v914, %v1017
    %1019 = vmatmul.f32.gmra.mxu0 %v474
    %v1020 = vpop.f32.mrf.mxu0
    %v1021 = vadd.f32 %v914, %v1020
    %1022 = vmatmul.f32.gmra.mxu0 %v476
    %v1023 = vpop.f32.mrf.mxu0
    %v1024 = vadd.f32 %v914, %v1023
    %1025 = vmatmul.f32.gmra.mxu0 %v478
    %v1026 = vpop.f32.mrf.mxu0
    %v1027 = vadd.f32 %v914, %v1026
    %1028 = vdwg.mxu0
    %1029 = vmatpush.msra.mxu0 %v911
    %1030 = vmatpush.msra.mxu0 %v909
    %1031 = vmatpush.msra.mxu0 %v906
    %1032 = vmatpush.msra.mxu0 %v904
    %1033 = vmatpush.msra.mxu0 %v901
    %1034 = vmatpush.msra.mxu0 %v899
    %1035 = vmatpush.msra.mxu0 %v896
    %1036 = vmatpush.msra.mxu0 %v894
    %1037 = vmatpush.msra.mxu0 %v891
    %1038 = vmatpush.msra.mxu0 %v889
    %1039 = vmatpush.msra.mxu0 %v886
    %1040 = vmatpush.msra.mxu0 %v884
    %1041 = vmatpush.msra.mxu0 %v881
    %1042 = vmatpush.msra.mxu0 %v879
    %1043 = vmatpush.msra.mxu0 %v876
    %1044 = vmatpush.msra.mxu0 %v874
    %1045 = vmatmul.f32.gmra.mxu0 %v417
    %v1046 = vpop.f32.mrf.mxu0
    %v1047 = vadd.f32 %v934, %v1046
    %1048 = vmatmul.f32.gmra.mxu0 %v419
    %v1049 = vpop.f32.mrf.mxu0
    %v1050 = vadd.f32 %v937, %v1049
    %1051 = vmatmul.f32.gmra.mxu0 %v421
    %v1052 = vpop.f32.mrf.mxu0
    %v1053 = vadd.f32 %v940, %v1052
    %1054 = vmatmul.f32.gmra.mxu0 %v423
    %v1055 = vpop.f32.mrf.mxu0
    %v1056 = vadd.f32 %v943, %v1055
    %1057 = vmatmul.f32.gmra.mxu0 %v425
    %v1058 = vpop.f32.mrf.mxu0
    %v1059 = vadd.f32 %v946, %v1058
    %1060 = vmatmul.f32.gmra.mxu0 %v427
    %v1061 = vpop.f32.mrf.mxu0
    %v1062 = vadd.f32 %v949, %v1061
    %1063 = vmatmul.f32.gmra.mxu0 %v429
    %v1064 = vpop.f32.mrf.mxu0
    %v1065 = vadd.f32 %v952, %v1064
    %1066 = vmatmul.f32.gmra.mxu0 %v431
    %v1067 = vpop.f32.mrf.mxu0
    %v1068 = vadd.f32 %v955, %v1067
    %1069 = vmatmul.f32.gmra.mxu0 %v433
    %v1070 = vpop.f32.mrf.mxu0
    %v1071 = vadd.f32 %v958, %v1070
    %1072 = vmatmul.f32.gmra.mxu0 %v435
    %v1073 = vpop.f32.mrf.mxu0
    %v1074 = vadd.f32 %v961, %v1073
    %1075 = vmatmul.f32.gmra.mxu0 %v437
    %v1076 = vpop.f32.mrf.mxu0
    %v1077 = vadd.f32 %v964, %v1076
    %1078 = vmatmul.f32.gmra.mxu0 %v439
    %v1079 = vpop.f32.mrf.mxu0
    %v1080 = vadd.f32 %v967, %v1079
    %1081 = vmatmul.f32.gmra.mxu0 %v441
    %v1082 = vpop.f32.mrf.mxu0
    %v1083 = vadd.f32 %v970, %v1082
    %1084 = vmatmul.f32.gmra.mxu0 %v443
    %v1085 = vpop.f32.mrf.mxu0
    %v1086 = vadd.f32 %v973, %v1085
    %1087 = vmatmul.f32.gmra.mxu0 %v445
    %v1088 = vpop.f32.mrf.mxu0
    %v1089 = vadd.f32 %v976, %v1088
    %1090 = vmatmul.f32.gmra.mxu0 %v447
    %v1091 = vpop.f32.mrf.mxu0
    %v1092 = vadd.f32 %v979, %v1091
    %1093 = vmatmul.f32.gmra.mxu0 %v449
    %v1094 = vpop.f32.mrf.mxu0
    %v1095 = vadd.f32 %v982, %v1094
    %1096 = vmatmul.f32.gmra.mxu0 %v451
    %v1097 = vpop.f32.mrf.mxu0
    %v1098 = vadd.f32 %v985, %v1097
    %1099 = vmatmul.f32.gmra.mxu0 %v453
    %v1100 = vpop.f32.mrf.mxu0
    %v1101 = vadd.f32 %v988, %v1100
    %1102 = vmatmul.f32.gmra.mxu0 %v455
    %v1103 = vpop.f32.mrf.mxu0
    %v1104 = vadd.f32 %v991, %v1103
    %1105 = vmatmul.f32.gmra.mxu0 %v457
    %v1106 = vpop.f32.mrf.mxu0
    %v1107 = vadd.f32 %v994, %v1106
    %1108 = vmatmul.f32.gmra.mxu0 %v459
    %v1109 = vpop.f32.mrf.mxu0
    %v1110 = vadd.f32 %v997, %v1109
    %1111 = vmatmul.f32.gmra.mxu0 %v461
    %v1112 = vpop.f32.mrf.mxu0
    %v1113 = vadd.f32 %v1000, %v1112
    %1114 = vmatmul.f32.gmra.mxu0 %v463
    %v1115 = vpop.f32.mrf.mxu0
    %v1116 = vadd.f32 %v1003, %v1115
    %1117 = vmatmul.f32.gmra.mxu0 %v465
    %v1118 = vpop.f32.mrf.mxu0
    %v1119 = vadd.f32 %v1006, %v1118
    %1120 = vmatmul.f32.gmra.mxu0 %v467
    %v1121 = vpop.f32.mrf.mxu0
    %v1122 = vadd.f32 %v1009, %v1121
    %1123 = vmatmul.f32.gmra.mxu0 %v469
    %v1124 = vpop.f32.mrf.mxu0
    %v1125 = vadd.f32 %v1012, %v1124
    %1126 = vmatmul.f32.gmra.mxu0 %v471
    %v1127 = vpop.f32.mrf.mxu0
    %v1128 = vadd.f32 %v1015, %v1127
    %1129 = vmatmul.f32.gmra.mxu0 %v473
    %v1130 = vpop.f32.mrf.mxu0
    %v1131 = vadd.f32 %v1018, %v1130
    %1132 = vmatmul.f32.gmra.mxu0 %v475
    %v1133 = vpop.f32.mrf.mxu0
    %v1134 = vadd.f32 %v1021, %v1133
    %1135 = vmatmul.f32.gmra.mxu0 %v477
    %v1136 = vpop.f32.mrf.mxu0
    %v1137 = vadd.f32 %v1024, %v1136
    %1138 = vmatmul.f32.gmra.mxu0 %v479
    %v1139 = vpop.f32.mrf.mxu0
    %v1140 = vadd.f32 %v1027, %v1139
    %1141 = vdwg.mxu0
    %v1142 = vmax.f32 %v1047, 0.0
    %v1143 = vmax.f32 %v1050, 0.0
    %v1144 = vmax.f32 %v1053, 0.0
    %v1145 = vmax.f32 %v1056, 0.0
    %v1146 = vmax.f32 %v1059, 0.0
    %v1147 = vmax.f32 %v1062, 0.0
    %v1148 = vmax.f32 %v1065, 0.0
    %v1149 = vmax.f32 %v1068, 0.0
    %v1150 = vmax.f32 %v1071, 0.0
    %v1151 = vmax.f32 %v1074, 0.0
    %v1152 = vmax.f32 %v1077, 0.0
    %v1153 = vmax.f32 %v1080, 0.0
    %v1154 = vmax.f32 %v1083, 0.0
    %v1155 = vmax.f32 %v1086, 0.0
    %v1156 = vmax.f32 %v1089, 0.0
    %v1157 = vmax.f32 %v1092, 0.0
    %v1158 = vmax.f32 %v1095, 0.0
    %v1159 = vmax.f32 %v1098, 0.0
    %v1160 = vmax.f32 %v1101, 0.0
    %v1161 = vmax.f32 %v1104, 0.0
    %v1162 = vmax.f32 %v1107, 0.0
    %v1163 = vmax.f32 %v1110, 0.0
    %v1164 = vmax.f32 %v1113, 0.0
    %v1165 = vmax.f32 %v1116, 0.0
    %v1166 = vmax.f32 %v1119, 0.0
    %v1167 = vmax.f32 %v1122, 0.0
    %v1168 = vmax.f32 %v1125, 0.0
    %v1169 = vmax.f32 %v1128, 0.0
    %v1170 = vmax.f32 %v1131, 0.0
    %v1171 = vmax.f32 %v1134, 0.0
    %v1172 = vmax.f32 %v1137, 0.0
    %v1173 = vmax.f32 %v1140, 0.0
    %v1174 = vpack.c.bf16 %v1143, %v1142
    %v1175 = vpack.c.bf16 %v1145, %v1144
    %v1176 = vpack.c.bf16 %v1147, %v1146
    %v1177 = vpack.c.bf16 %v1149, %v1148
    %v1178 = vpack.c.bf16 %v1151, %v1150
    %v1179 = vpack.c.bf16 %v1153, %v1152
    %v1180 = vpack.c.bf16 %v1155, %v1154
    %v1181 = vpack.c.bf16 %v1157, %v1156
    %v1182 = vpack.c.bf16 %v1159, %v1158
    %v1183 = vpack.c.bf16 %v1161, %v1160
    %v1184 = vpack.c.bf16 %v1163, %v1162
    %v1185 = vpack.c.bf16 %v1165, %v1164
    %v1186 = vpack.c.bf16 %v1167, %v1166
    %v1187 = vpack.c.bf16 %v1169, %v1168
    %v1188 = vpack.c.bf16 %v1171, %v1170
    %v1189 = vpack.c.bf16 %v1173, %v1172
    %s1190 = scalar_lea.vmem %s4, 128
    %v1191 = vld [vmem:[%s1190] sm:$0xf]
    %v1192 = vld [vmem:[%s1190 + $0x4] sm:$0xf]
    %v1193 = vld [vmem:[%s1190 + $0x8] sm:$0xf]
    %v1194 = vld [vmem:[%s1190 + $0xc] sm:$0xf]
    %v1195 = vld [vmem:[%s1190 + $0x10] sm:$0xf]
    %v1196 = vld [vmem:[%s1190 + $0x14] sm:$0xf]
    %v1197 = vld [vmem:[%s1190 + $0x18] sm:$0xf]
    %v1198 = vld [vmem:[%s1190 + $0x1c] sm:$0xf]
    %v1199 = vld [vmem:[%s1190 + $0x20] sm:$0xf]
    %v1200 = vld [vmem:[%s1190 + $0x24] sm:$0xf]
    %v1201 = vld [vmem:[%s1190 + $0x28] sm:$0xf]
    %v1202 = vld [vmem:[%s1190 + $0x2c] sm:$0xf]
    %v1203 = vld [vmem:[%s1190 + $0x30] sm:$0xf]
    %v1204 = vld [vmem:[%s1190 + $0x34] sm:$0xf]
    %v1205 = vld [vmem:[%s1190 + $0x38] sm:$0xf]
    %v1206 = vld [vmem:[%s1190 + $0x3c] sm:$0xf]
    %s1207 = scalar_lea.vmem %s5, 2
    %v1208 = vld [vmem:[%s1207] sm:$0x1]
    %v1225 = vunpack.c.l.b16 %v1191
    %v1226 = vunpack.c.l.b16 %v1192
    %v1227 = vunpack.c.l.b16 %v1193
    %v1228 = vunpack.c.l.b16 %v1194
    %v1229 = vunpack.c.l.b16 %v1195
    %v1230 = vunpack.c.l.b16 %v1196
    %v1231 = vunpack.c.l.b16 %v1197
    %v1232 = vunpack.c.l.b16 %v1198
    %v1233 = vunpack.c.l.b16 %v1199
    %v1234 = vunpack.c.l.b16 %v1200
    %v1235 = vunpack.c.l.b16 %v1201
    %v1236 = vunpack.c.l.b16 %v1202
    %v1237 = vunpack.c.l.b16 %v1203
    %v1238 = vunpack.c.l.b16 %v1204
    %v1239 = vunpack.c.l.b16 %v1205
    %v1240 = vunpack.c.l.b16 %v1206
    %v1241 = vpack.c.b16 %v1226, %v1225
    %v1242 = vpack.c.b16 %v1228, %v1227
    %v1243 = vpack.c.b16 %v1230, %v1229
    %v1244 = vpack.c.b16 %v1232, %v1231
    %v1245 = vpack.c.b16 %v1234, %v1233
    %v1246 = vpack.c.b16 %v1236, %v1235
    %v1247 = vpack.c.b16 %v1238, %v1237
    %v1248 = vpack.c.b16 %v1240, %v1239
    %1257 = vmatpush.bf16.msra.mxu0 %v1248
    %1258 = vmatpush.bf16.msra.mxu0 %v1247
    %1259 = vmatpush.bf16.msra.mxu0 %v1246
    %1260 = vmatpush.bf16.msra.mxu0 %v1245
    %1261 = vmatpush.bf16.msra.mxu0 %v1244
    %1262 = vmatpush.bf16.msra.mxu0 %v1243
    %1263 = vmatpush.bf16.msra.mxu0 %v1242
    %1264 = vmatpush.bf16.msra.mxu0 %v1241
    %1265 = vmatmul.bf16.gmra.mxu0 %v1174
    %v1266 = vpop.f32.mrf.mxu0
    %v1267 = vadd.f32 0.0, %v1266
    %v1268 = vpop.f32.mrf.mxu0
    %v1269 = vadd.f32 0.0, %v1268
    %1270 = vmatmul.bf16.gmra.mxu0 %v1175
    %v1271 = vpop.f32.mrf.mxu0
    %v1272 = vadd.f32 0.0, %v1271
    %v1273 = vpop.f32.mrf.mxu0
    %v1274 = vadd.f32 0.0, %v1273
    %1275 = vmatmul.bf16.gmra.mxu0 %v1176
    %v1276 = vpop.f32.mrf.mxu0
    %v1277 = vadd.f32 0.0, %v1276
    %v1278 = vpop.f32.mrf.mxu0
    %v1279 = vadd.f32 0.0, %v1278
    %1280 = vmatmul.bf16.gmra.mxu0 %v1177
    %v1281 = vpop.f32.mrf.mxu0
    %v1282 = vadd.f32 0.0, %v1281
    %v1283 = vpop.f32.mrf.mxu0
    %v1284 = vadd.f32 0.0, %v1283
    %1285 = vmatmul.bf16.gmra.mxu0 %v1178
    %v1286 = vpop.f32.mrf.mxu0
    %v1287 = vadd.f32 0.0, %v1286
    %v1288 = vpop.f32.mrf.mxu0
    %v1289 = vadd.f32 0.0, %v1288
    %1290 = vmatmul.bf16.gmra.mxu0 %v1179
    %v1291 = vpop.f32.mrf.mxu0
    %v1292 = vadd.f32 0.0, %v1291
    %v1293 = vpop.f32.mrf.mxu0
    %v1294 = vadd.f32 0.0, %v1293
    %1295 = vmatmul.bf16.gmra.mxu0 %v1180
    %v1296 = vpop.f32.mrf.mxu0
    %v1297 = vadd.f32 0.0, %v1296
    %v1298 = vpop.f32.mrf.mxu0
    %v1299 = vadd.f32 0.0, %v1298
    %1300 = vmatmul.bf16.gmra.mxu0 %v1181
    %v1301 = vpop.f32.mrf.mxu0
    %v1302 = vadd.f32 0.0, %v1301
    %v1303 = vpop.f32.mrf.mxu0
    %v1304 = vadd.f32 0.0, %v1303
    %1305 = vmatmul.bf16.gmra.mxu0 %v1182
    %v1306 = vpop.f32.mrf.mxu0
    %v1307 = vadd.f32 0.0, %v1306
    %v1308 = vpop.f32.mrf.mxu0
    %v1309 = vadd.f32 0.0, %v1308
    %1310 = vmatmul.bf16.gmra.mxu0 %v1183
    %v1311 = vpop.f32.mrf.mxu0
    %v1312 = vadd.f32 0.0, %v1311
    %v1313 = vpop.f32.mrf.mxu0
    %v1314 = vadd.f32 0.0, %v1313
    %1315 = vmatmul.bf16.gmra.mxu0 %v1184
    %v1316 = vpop.f32.mrf.mxu0
    %v1317 = vadd.f32 0.0, %v1316
    %v1318 = vpop.f32.mrf.mxu0
    %v1319 = vadd.f32 0.0, %v1318
    %1320 = vmatmul.bf16.gmra.mxu0 %v1185
    %v1321 = vpop.f32.mrf.mxu0
    %v1322 = vadd.f32 0.0, %v1321
    %v1323 = vpop.f32.mrf.mxu0
    %v1324 = vadd.f32 0.0, %v1323
    %1325 = vmatmul.bf16.gmra.mxu0 %v1186
    %v1326 = vpop.f32.mrf.mxu0
    %v1327 = vadd.f32 0.0, %v1326
    %v1328 = vpop.f32.mrf.mxu0
    %v1329 = vadd.f32 0.0, %v1328
    %1330 = vmatmul.bf16.gmra.mxu0 %v1187
    %v1331 = vpop.f32.mrf.mxu0
    %v1332 = vadd.f32 0.0, %v1331
    %v1333 = vpop.f32.mrf.mxu0
    %v1334 = vadd.f32 0.0, %v1333
    %1335 = vmatmul.bf16.gmra.mxu0 %v1188
    %v1336 = vpop.f32.mrf.mxu0
    %v1337 = vadd.f32 0.0, %v1336
    %v1338 = vpop.f32.mrf.mxu0
    %v1339 = vadd.f32 0.0, %v1338
    %1340 = vmatmul.bf16.gmra.mxu0 %v1189
    %v1341 = vpop.f32.mrf.mxu0
    %v1342 = vadd.f32 0.0, %v1341
    %v1343 = vpop.f32.mrf.mxu0
    %v1344 = vadd.f32 0.0, %v1343
    %1345 = vdwg.mxu0
    %v1347 = vperm.slane %v1208, 0
    %1349 = vmatpush.msra.mxu0 %v1304
    %1350 = vmatpush.msra.mxu0 %v1302
    %1351 = vmatpush.msra.mxu0 %v1299
    %1352 = vmatpush.msra.mxu0 %v1297
    %1353 = vmatpush.msra.mxu0 %v1294
    %1354 = vmatpush.msra.mxu0 %v1292
    %1355 = vmatpush.msra.mxu0 %v1289
    %1356 = vmatpush.msra.mxu0 %v1287
    %1357 = vmatpush.msra.mxu0 %v1284
    %1358 = vmatpush.msra.mxu0 %v1282
    %1359 = vmatpush.msra.mxu0 %v1279
    %1360 = vmatpush.msra.mxu0 %v1277
    %1361 = vmatpush.msra.mxu0 %v1274
    %1362 = vmatpush.msra.mxu0 %v1272
    %1363 = vmatpush.msra.mxu0 %v1269
    %1364 = vmatpush.msra.mxu0 %v1267
    %1365 = vmatmul.f32.gmra.mxu0 %v416
    %v1366 = vpop.f32.mrf.mxu0
    %v1367 = vadd.f32 %v1347, %v1366
    %1368 = vmatmul.f32.gmra.mxu0 %v418
    %v1369 = vpop.f32.mrf.mxu0
    %v1370 = vadd.f32 %v1347, %v1369
    %1371 = vmatmul.f32.gmra.mxu0 %v420
    %v1372 = vpop.f32.mrf.mxu0
    %v1373 = vadd.f32 %v1347, %v1372
    %1374 = vmatmul.f32.gmra.mxu0 %v422
    %v1375 = vpop.f32.mrf.mxu0
    %v1376 = vadd.f32 %v1347, %v1375
    %1377 = vmatmul.f32.gmra.mxu0 %v424
    %v1378 = vpop.f32.mrf.mxu0
    %v1379 = vadd.f32 %v1347, %v1378
    %1380 = vmatmul.f32.gmra.mxu0 %v426
    %v1381 = vpop.f32.mrf.mxu0
    %v1382 = vadd.f32 %v1347, %v1381
    %1383 = vmatmul.f32.gmra.mxu0 %v428
    %v1384 = vpop.f32.mrf.mxu0
    %v1385 = vadd.f32 %v1347, %v1384
    %1386 = vmatmul.f32.gmra.mxu0 %v430
    %v1387 = vpop.f32.mrf.mxu0
    %v1388 = vadd.f32 %v1347, %v1387
    %1389 = vmatmul.f32.gmra.mxu0 %v432
    %v1390 = vpop.f32.mrf.mxu0
    %v1391 = vadd.f32 %v1347, %v1390
    %1392 = vmatmul.f32.gmra.mxu0 %v434
    %v1393 = vpop.f32.mrf.mxu0
    %v1394 = vadd.f32 %v1347, %v1393
    %1395 = vmatmul.f32.gmra.mxu0 %v436
    %v1396 = vpop.f32.mrf.mxu0
    %v1397 = vadd.f32 %v1347, %v1396
    %1398 = vmatmul.f32.gmra.mxu0 %v438
    %v1399 = vpop.f32.mrf.mxu0
    %v1400 = vadd.f32 %v1347, %v1399
    %1401 = vmatmul.f32.gmra.mxu0 %v440
    %v1402 = vpop.f32.mrf.mxu0
    %v1403 = vadd.f32 %v1347, %v1402
    %1404 = vmatmul.f32.gmra.mxu0 %v442
    %v1405 = vpop.f32.mrf.mxu0
    %v1406 = vadd.f32 %v1347, %v1405
    %1407 = vmatmul.f32.gmra.mxu0 %v444
    %v1408 = vpop.f32.mrf.mxu0
    %v1409 = vadd.f32 %v1347, %v1408
    %1410 = vmatmul.f32.gmra.mxu0 %v446
    %v1411 = vpop.f32.mrf.mxu0
    %v1412 = vadd.f32 %v1347, %v1411
    %1413 = vmatmul.f32.gmra.mxu0 %v448
    %v1414 = vpop.f32.mrf.mxu0
    %v1415 = vadd.f32 %v1347, %v1414
    %1416 = vmatmul.f32.gmra.mxu0 %v450
    %v1417 = vpop.f32.mrf.mxu0
    %v1418 = vadd.f32 %v1347, %v1417
    %1419 = vmatmul.f32.gmra.mxu0 %v452
    %v1420 = vpop.f32.mrf.mxu0
    %v1421 = vadd.f32 %v1347, %v1420
    %1422 = vmatmul.f32.gmra.mxu0 %v454
    %v1423 = vpop.f32.mrf.mxu0
    %v1424 = vadd.f32 %v1347, %v1423
    %1425 = vmatmul.f32.gmra.mxu0 %v456
    %v1426 = vpop.f32.mrf.mxu0
    %v1427 = vadd.f32 %v1347, %v1426
    %1428 = vmatmul.f32.gmra.mxu0 %v458
    %v1429 = vpop.f32.mrf.mxu0
    %v1430 = vadd.f32 %v1347, %v1429
    %1431 = vmatmul.f32.gmra.mxu0 %v460
    %v1432 = vpop.f32.mrf.mxu0
    %v1433 = vadd.f32 %v1347, %v1432
    %1434 = vmatmul.f32.gmra.mxu0 %v462
    %v1435 = vpop.f32.mrf.mxu0
    %v1436 = vadd.f32 %v1347, %v1435
    %1437 = vmatmul.f32.gmra.mxu0 %v464
    %v1438 = vpop.f32.mrf.mxu0
    %v1439 = vadd.f32 %v1347, %v1438
    %1440 = vmatmul.f32.gmra.mxu0 %v466
    %v1441 = vpop.f32.mrf.mxu0
    %v1442 = vadd.f32 %v1347, %v1441
    %1443 = vmatmul.f32.gmra.mxu0 %v468
    %v1444 = vpop.f32.mrf.mxu0
    %v1445 = vadd.f32 %v1347, %v1444
    %1446 = vmatmul.f32.gmra.mxu0 %v470
    %v1447 = vpop.f32.mrf.mxu0
    %v1448 = vadd.f32 %v1347, %v1447
    %1449 = vmatmul.f32.gmra.mxu0 %v472
    %v1450 = vpop.f32.mrf.mxu0
    %v1451 = vadd.f32 %v1347, %v1450
    %1452 = vmatmul.f32.gmra.mxu0 %v474
    %v1453 = vpop.f32.mrf.mxu0
    %v1454 = vadd.f32 %v1347, %v1453
    %1455 = vmatmul.f32.gmra.mxu0 %v476
    %v1456 = vpop.f32.mrf.mxu0
    %v1457 = vadd.f32 %v1347, %v1456
    %1458 = vmatmul.f32.gmra.mxu0 %v478
    %v1459 = vpop.f32.mrf.mxu0
    %v1460 = vadd.f32 %v1347, %v1459
    %1461 = vdwg.mxu0
    %1462 = vmatpush.msra.mxu0 %v1344
    %1463 = vmatpush.msra.mxu0 %v1342
    %1464 = vmatpush.msra.mxu0 %v1339
    %1465 = vmatpush.msra.mxu0 %v1337
    %1466 = vmatpush.msra.mxu0 %v1334
    %1467 = vmatpush.msra.mxu0 %v1332
    %1468 = vmatpush.msra.mxu0 %v1329
    %1469 = vmatpush.msra.mxu0 %v1327
    %1470 = vmatpush.msra.mxu0 %v1324
    %1471 = vmatpush.msra.mxu0 %v1322
    %1472 = vmatpush.msra.mxu0 %v1319
    %1473 = vmatpush.msra.mxu0 %v1317
    %1474 = vmatpush.msra.mxu0 %v1314
    %1475 = vmatpush.msra.mxu0 %v1312
    %1476 = vmatpush.msra.mxu0 %v1309
    %1477 = vmatpush.msra.mxu0 %v1307
    %1478 = vmatmul.f32.gmra.mxu0 %v417
    %v1479 = vpop.f32.mrf.mxu0
    %v1480 = vadd.f32 %v1367, %v1479
    %1481 = vmatmul.f32.gmra.mxu0 %v419
    %v1482 = vpop.f32.mrf.mxu0
    %v1483 = vadd.f32 %v1370, %v1482
    %1484 = vmatmul.f32.gmra.mxu0 %v421
    %v1485 = vpop.f32.mrf.mxu0
    %v1486 = vadd.f32 %v1373, %v1485
    %1487 = vmatmul.f32.gmra.mxu0 %v423
    %v1488 = vpop.f32.mrf.mxu0
    %v1489 = vadd.f32 %v1376, %v1488
    %1490 = vmatmul.f32.gmra.mxu0 %v425
    %v1491 = vpop.f32.mrf.mxu0
    %v1492 = vadd.f32 %v1379, %v1491
    %1493 = vmatmul.f32.gmra.mxu0 %v427
    %v1494 = vpop.f32.mrf.mxu0
    %v1495 = vadd.f32 %v1382, %v1494
    %1496 = vmatmul.f32.gmra.mxu0 %v429
    %v1497 = vpop.f32.mrf.mxu0
    %v1498 = vadd.f32 %v1385, %v1497
    %1499 = vmatmul.f32.gmra.mxu0 %v431
    %v1500 = vpop.f32.mrf.mxu0
    %v1501 = vadd.f32 %v1388, %v1500
    %1502 = vmatmul.f32.gmra.mxu0 %v433
    %v1503 = vpop.f32.mrf.mxu0
    %v1504 = vadd.f32 %v1391, %v1503
    %1505 = vmatmul.f32.gmra.mxu0 %v435
    %v1506 = vpop.f32.mrf.mxu0
    %v1507 = vadd.f32 %v1394, %v1506
    %1508 = vmatmul.f32.gmra.mxu0 %v437
    %v1509 = vpop.f32.mrf.mxu0
    %v1510 = vadd.f32 %v1397, %v1509
    %1511 = vmatmul.f32.gmra.mxu0 %v439
    %v1512 = vpop.f32.mrf.mxu0
    %v1513 = vadd.f32 %v1400, %v1512
    %1514 = vmatmul.f32.gmra.mxu0 %v441
    %v1515 = vpop.f32.mrf.mxu0
    %v1516 = vadd.f32 %v1403, %v1515
    %1517 = vmatmul.f32.gmra.mxu0 %v443
    %v1518 = vpop.f32.mrf.mxu0
    %v1519 = vadd.f32 %v1406, %v1518
    %1520 = vmatmul.f32.gmra.mxu0 %v445
    %v1521 = vpop.f32.mrf.mxu0
    %v1522 = vadd.f32 %v1409, %v1521
    %1523 = vmatmul.f32.gmra.mxu0 %v447
    %v1524 = vpop.f32.mrf.mxu0
    %v1525 = vadd.f32 %v1412, %v1524
    %1526 = vmatmul.f32.gmra.mxu0 %v449
    %v1527 = vpop.f32.mrf.mxu0
    %v1528 = vadd.f32 %v1415, %v1527
    %1529 = vmatmul.f32.gmra.mxu0 %v451
    %v1530 = vpop.f32.mrf.mxu0
    %v1531 = vadd.f32 %v1418, %v1530
    %1532 = vmatmul.f32.gmra.mxu0 %v453
    %v1533 = vpop.f32.mrf.mxu0
    %v1534 = vadd.f32 %v1421, %v1533
    %1535 = vmatmul.f32.gmra.mxu0 %v455
    %v1536 = vpop.f32.mrf.mxu0
    %v1537 = vadd.f32 %v1424, %v1536
    %1538 = vmatmul.f32.gmra.mxu0 %v457
    %v1539 = vpop.f32.mrf.mxu0
    %v1540 = vadd.f32 %v1427, %v1539
    %1541 = vmatmul.f32.gmra.mxu0 %v459
    %v1542 = vpop.f32.mrf.mxu0
    %v1543 = vadd.f32 %v1430, %v1542
    %1544 = vmatmul.f32.gmra.mxu0 %v461
    %v1545 = vpop.f32.mrf.mxu0
    %v1546 = vadd.f32 %v1433, %v1545
    %1547 = vmatmul.f32.gmra.mxu0 %v463
    %v1548 = vpop.f32.mrf.mxu0
    %v1549 = vadd.f32 %v1436, %v1548
    %1550 = vmatmul.f32.gmra.mxu0 %v465
    %v1551 = vpop.f32.mrf.mxu0
    %v1552 = vadd.f32 %v1439, %v1551
    %1553 = vmatmul.f32.gmra.mxu0 %v467
    %v1554 = vpop.f32.mrf.mxu0
    %v1555 = vadd.f32 %v1442, %v1554
    %1556 = vmatmul.f32.gmra.mxu0 %v469
    %v1557 = vpop.f32.mrf.mxu0
    %v1558 = vadd.f32 %v1445, %v1557
    %1559 = vmatmul.f32.gmra.mxu0 %v471
    %v1560 = vpop.f32.mrf.mxu0
    %v1561 = vadd.f32 %v1448, %v1560
    %1562 = vmatmul.f32.gmra.mxu0 %v473
    %v1563 = vpop.f32.mrf.mxu0
    %v1564 = vadd.f32 %v1451, %v1563
    %1565 = vmatmul.f32.gmra.mxu0 %v475
    %v1566 = vpop.f32.mrf.mxu0
    %v1567 = vadd.f32 %v1454, %v1566
    %1568 = vmatmul.f32.gmra.mxu0 %v477
    %v1569 = vpop.f32.mrf.mxu0
    %v1570 = vadd.f32 %v1457, %v1569
    %1571 = vmatmul.f32.gmra.mxu0 %v479
    %v1572 = vpop.f32.mrf.mxu0
    %v1573 = vadd.f32 %v1460, %v1572
    %1574 = vdwg.mxu0
    %v1575 = vmax.f32 %v1480, 0.0
    %v1576 = vmax.f32 %v1483, 0.0
    %v1577 = vmax.f32 %v1486, 0.0
    %v1578 = vmax.f32 %v1489, 0.0
    %v1579 = vmax.f32 %v1492, 0.0
    %v1580 = vmax.f32 %v1495, 0.0
    %v1581 = vmax.f32 %v1498, 0.0
    %v1582 = vmax.f32 %v1501, 0.0
    %v1583 = vmax.f32 %v1504, 0.0
    %v1584 = vmax.f32 %v1507, 0.0
    %v1585 = vmax.f32 %v1510, 0.0
    %v1586 = vmax.f32 %v1513, 0.0
    %v1587 = vmax.f32 %v1516, 0.0
    %v1588 = vmax.f32 %v1519, 0.0
    %v1589 = vmax.f32 %v1522, 0.0
    %v1590 = vmax.f32 %v1525, 0.0
    %v1591 = vmax.f32 %v1528, 0.0
    %v1592 = vmax.f32 %v1531, 0.0
    %v1593 = vmax.f32 %v1534, 0.0
    %v1594 = vmax.f32 %v1537, 0.0
    %v1595 = vmax.f32 %v1540, 0.0
    %v1596 = vmax.f32 %v1543, 0.0
    %v1597 = vmax.f32 %v1546, 0.0
    %v1598 = vmax.f32 %v1549, 0.0
    %v1599 = vmax.f32 %v1552, 0.0
    %v1600 = vmax.f32 %v1555, 0.0
    %v1601 = vmax.f32 %v1558, 0.0
    %v1602 = vmax.f32 %v1561, 0.0
    %v1603 = vmax.f32 %v1564, 0.0
    %v1604 = vmax.f32 %v1567, 0.0
    %v1605 = vmax.f32 %v1570, 0.0
    %v1606 = vmax.f32 %v1573, 0.0
    %v1607 = vpack.c.bf16 %v1576, %v1575
    %v1608 = vpack.c.bf16 %v1578, %v1577
    %v1609 = vpack.c.bf16 %v1580, %v1579
    %v1610 = vpack.c.bf16 %v1582, %v1581
    %v1611 = vpack.c.bf16 %v1584, %v1583
    %v1612 = vpack.c.bf16 %v1586, %v1585
    %v1613 = vpack.c.bf16 %v1588, %v1587
    %v1614 = vpack.c.bf16 %v1590, %v1589
    %v1615 = vpack.c.bf16 %v1592, %v1591
    %v1616 = vpack.c.bf16 %v1594, %v1593
    %v1617 = vpack.c.bf16 %v1596, %v1595
    %v1618 = vpack.c.bf16 %v1598, %v1597
    %v1619 = vpack.c.bf16 %v1600, %v1599
    %v1620 = vpack.c.bf16 %v1602, %v1601
    %v1621 = vpack.c.bf16 %v1604, %v1603
    %v1622 = vpack.c.bf16 %v1606, %v1605
    %s1623 = scalar_lea.vmem %s4, 192
    %v1624 = vld [vmem:[%s1623] sm:$0xf]
    %v1625 = vld [vmem:[%s1623 + $0x4] sm:$0xf]
    %v1626 = vld [vmem:[%s1623 + $0x8] sm:$0xf]
    %v1627 = vld [vmem:[%s1623 + $0xc] sm:$0xf]
    %v1628 = vld [vmem:[%s1623 + $0x10] sm:$0xf]
    %v1629 = vld [vmem:[%s1623 + $0x14] sm:$0xf]
    %v1630 = vld [vmem:[%s1623 + $0x18] sm:$0xf]
    %v1631 = vld [vmem:[%s1623 + $0x1c] sm:$0xf]
    %v1632 = vld [vmem:[%s1623 + $0x20] sm:$0xf]
    %v1633 = vld [vmem:[%s1623 + $0x24] sm:$0xf]
    %v1634 = vld [vmem:[%s1623 + $0x28] sm:$0xf]
    %v1635 = vld [vmem:[%s1623 + $0x2c] sm:$0xf]
    %v1636 = vld [vmem:[%s1623 + $0x30] sm:$0xf]
    %v1637 = vld [vmem:[%s1623 + $0x34] sm:$0xf]
    %v1638 = vld [vmem:[%s1623 + $0x38] sm:$0xf]
    %v1639 = vld [vmem:[%s1623 + $0x3c] sm:$0xf]
    %s1640 = scalar_lea.vmem %s5, 3
    %v1641 = vld [vmem:[%s1640] sm:$0x1]
    %v1658 = vunpack.c.l.b16 %v1624
    %v1659 = vunpack.c.l.b16 %v1625
    %v1660 = vunpack.c.l.b16 %v1626
    %v1661 = vunpack.c.l.b16 %v1627
    %v1662 = vunpack.c.l.b16 %v1628
    %v1663 = vunpack.c.l.b16 %v1629
    %v1664 = vunpack.c.l.b16 %v1630
    %v1665 = vunpack.c.l.b16 %v1631
    %v1666 = vunpack.c.l.b16 %v1632
    %v1667 = vunpack.c.l.b16 %v1633
    %v1668 = vunpack.c.l.b16 %v1634
    %v1669 = vunpack.c.l.b16 %v1635
    %v1670 = vunpack.c.l.b16 %v1636
    %v1671 = vunpack.c.l.b16 %v1637
    %v1672 = vunpack.c.l.b16 %v1638
    %v1673 = vunpack.c.l.b16 %v1639
    %v1674 = vpack.c.b16 %v1659, %v1658
    %v1675 = vpack.c.b16 %v1661, %v1660
    %v1676 = vpack.c.b16 %v1663, %v1662
    %v1677 = vpack.c.b16 %v1665, %v1664
    %v1678 = vpack.c.b16 %v1667, %v1666
    %v1679 = vpack.c.b16 %v1669, %v1668
    %v1680 = vpack.c.b16 %v1671, %v1670
    %v1681 = vpack.c.b16 %v1673, %v1672
    %1690 = vmatpush.bf16.msra.mxu0 %v1681
    %1691 = vmatpush.bf16.msra.mxu0 %v1680
    %1692 = vmatpush.bf16.msra.mxu0 %v1679
    %1693 = vmatpush.bf16.msra.mxu0 %v1678
    %1694 = vmatpush.bf16.msra.mxu0 %v1677
    %1695 = vmatpush.bf16.msra.mxu0 %v1676
    %1696 = vmatpush.bf16.msra.mxu0 %v1675
    %1697 = vmatpush.bf16.msra.mxu0 %v1674
    %1698 = vmatmul.bf16.gmra.mxu0 %v1607
    %v1699 = vpop.f32.mrf.mxu0
    %v1700 = vadd.f32 0.0, %v1699
    %v1701 = vpop.f32.mrf.mxu0
    %v1702 = vadd.f32 0.0, %v1701
    %1703 = vmatmul.bf16.gmra.mxu0 %v1608
    %v1704 = vpop.f32.mrf.mxu0
    %v1705 = vadd.f32 0.0, %v1704
    %v1706 = vpop.f32.mrf.mxu0
    %v1707 = vadd.f32 0.0, %v1706
    %1708 = vmatmul.bf16.gmra.mxu0 %v1609
    %v1709 = vpop.f32.mrf.mxu0
    %v1710 = vadd.f32 0.0, %v1709
    %v1711 = vpop.f32.mrf.mxu0
    %v1712 = vadd.f32 0.0, %v1711
    %1713 = vmatmul.bf16.gmra.mxu0 %v1610
    %v1714 = vpop.f32.mrf.mxu0
    %v1715 = vadd.f32 0.0, %v1714
    %v1716 = vpop.f32.mrf.mxu0
    %v1717 = vadd.f32 0.0, %v1716
    %1718 = vmatmul.bf16.gmra.mxu0 %v1611
    %v1719 = vpop.f32.mrf.mxu0
    %v1720 = vadd.f32 0.0, %v1719
    %v1721 = vpop.f32.mrf.mxu0
    %v1722 = vadd.f32 0.0, %v1721
    %1723 = vmatmul.bf16.gmra.mxu0 %v1612
    %v1724 = vpop.f32.mrf.mxu0
    %v1725 = vadd.f32 0.0, %v1724
    %v1726 = vpop.f32.mrf.mxu0
    %v1727 = vadd.f32 0.0, %v1726
    %1728 = vmatmul.bf16.gmra.mxu0 %v1613
    %v1729 = vpop.f32.mrf.mxu0
    %v1730 = vadd.f32 0.0, %v1729
    %v1731 = vpop.f32.mrf.mxu0
    %v1732 = vadd.f32 0.0, %v1731
    %1733 = vmatmul.bf16.gmra.mxu0 %v1614
    %v1734 = vpop.f32.mrf.mxu0
    %v1735 = vadd.f32 0.0, %v1734
    %v1736 = vpop.f32.mrf.mxu0
    %v1737 = vadd.f32 0.0, %v1736
    %1738 = vmatmul.bf16.gmra.mxu0 %v1615
    %v1739 = vpop.f32.mrf.mxu0
    %v1740 = vadd.f32 0.0, %v1739
    %v1741 = vpop.f32.mrf.mxu0
    %v1742 = vadd.f32 0.0, %v1741
    %1743 = vmatmul.bf16.gmra.mxu0 %v1616
    %v1744 = vpop.f32.mrf.mxu0
    %v1745 = vadd.f32 0.0, %v1744
    %v1746 = vpop.f32.mrf.mxu0
    %v1747 = vadd.f32 0.0, %v1746
    %1748 = vmatmul.bf16.gmra.mxu0 %v1617
    %v1749 = vpop.f32.mrf.mxu0
    %v1750 = vadd.f32 0.0, %v1749
    %v1751 = vpop.f32.mrf.mxu0
    %v1752 = vadd.f32 0.0, %v1751
    %1753 = vmatmul.bf16.gmra.mxu0 %v1618
    %v1754 = vpop.f32.mrf.mxu0
    %v1755 = vadd.f32 0.0, %v1754
    %v1756 = vpop.f32.mrf.mxu0
    %v1757 = vadd.f32 0.0, %v1756
    %1758 = vmatmul.bf16.gmra.mxu0 %v1619
    %v1759 = vpop.f32.mrf.mxu0
    %v1760 = vadd.f32 0.0, %v1759
    %v1761 = vpop.f32.mrf.mxu0
    %v1762 = vadd.f32 0.0, %v1761
    %1763 = vmatmul.bf16.gmra.mxu0 %v1620
    %v1764 = vpop.f32.mrf.mxu0
    %v1765 = vadd.f32 0.0, %v1764
    %v1766 = vpop.f32.mrf.mxu0
    %v1767 = vadd.f32 0.0, %v1766
    %1768 = vmatmul.bf16.gmra.mxu0 %v1621
    %v1769 = vpop.f32.mrf.mxu0
    %v1770 = vadd.f32 0.0, %v1769
    %v1771 = vpop.f32.mrf.mxu0
    %v1772 = vadd.f32 0.0, %v1771
    %1773 = vmatmul.bf16.gmra.mxu0 %v1622
    %v1774 = vpop.f32.mrf.mxu0
    %v1775 = vadd.f32 0.0, %v1774
    %v1776 = vpop.f32.mrf.mxu0
    %v1777 = vadd.f32 0.0, %v1776
    %1778 = vdwg.mxu0
    %v1780 = vperm.slane %v1641, 0
    %1782 = vmatpush.msra.mxu0 %v1737
    %1783 = vmatpush.msra.mxu0 %v1735
    %1784 = vmatpush.msra.mxu0 %v1732
    %1785 = vmatpush.msra.mxu0 %v1730
    %1786 = vmatpush.msra.mxu0 %v1727
    %1787 = vmatpush.msra.mxu0 %v1725
    %1788 = vmatpush.msra.mxu0 %v1722
    %1789 = vmatpush.msra.mxu0 %v1720
    %1790 = vmatpush.msra.mxu0 %v1717
    %1791 = vmatpush.msra.mxu0 %v1715
    %1792 = vmatpush.msra.mxu0 %v1712
    %1793 = vmatpush.msra.mxu0 %v1710
    %1794 = vmatpush.msra.mxu0 %v1707
    %1795 = vmatpush.msra.mxu0 %v1705
    %1796 = vmatpush.msra.mxu0 %v1702
    %1797 = vmatpush.msra.mxu0 %v1700
    %1798 = vmatmul.f32.gmra.mxu0 %v416
    %v1799 = vpop.f32.mrf.mxu0
    %v1800 = vadd.f32 %v1780, %v1799
    %1801 = vmatmul.f32.gmra.mxu0 %v418
    %v1802 = vpop.f32.mrf.mxu0
    %v1803 = vadd.f32 %v1780, %v1802
    %1804 = vmatmul.f32.gmra.mxu0 %v420
    %v1805 = vpop.f32.mrf.mxu0
    %v1806 = vadd.f32 %v1780, %v1805
    %1807 = vmatmul.f32.gmra.mxu0 %v422
    %v1808 = vpop.f32.mrf.mxu0
    %v1809 = vadd.f32 %v1780, %v1808
    %1810 = vmatmul.f32.gmra.mxu0 %v424
    %v1811 = vpop.f32.mrf.mxu0
    %v1812 = vadd.f32 %v1780, %v1811
    %1813 = vmatmul.f32.gmra.mxu0 %v426
    %v1814 = vpop.f32.mrf.mxu0
    %v1815 = vadd.f32 %v1780, %v1814
    %1816 = vmatmul.f32.gmra.mxu0 %v428
    %v1817 = vpop.f32.mrf.mxu0
    %v1818 = vadd.f32 %v1780, %v1817
    %1819 = vmatmul.f32.gmra.mxu0 %v430
    %v1820 = vpop.f32.mrf.mxu0
    %v1821 = vadd.f32 %v1780, %v1820
    %1822 = vmatmul.f32.gmra.mxu0 %v432
    %v1823 = vpop.f32.mrf.mxu0
    %v1824 = vadd.f32 %v1780, %v1823
    %1825 = vmatmul.f32.gmra.mxu0 %v434
    %v1826 = vpop.f32.mrf.mxu0
    %v1827 = vadd.f32 %v1780, %v1826
    %1828 = vmatmul.f32.gmra.mxu0 %v436
    %v1829 = vpop.f32.mrf.mxu0
    %v1830 = vadd.f32 %v1780, %v1829
    %1831 = vmatmul.f32.gmra.mxu0 %v438
    %v1832 = vpop.f32.mrf.mxu0
    %v1833 = vadd.f32 %v1780, %v1832
    %1834 = vmatmul.f32.gmra.mxu0 %v440
    %v1835 = vpop.f32.mrf.mxu0
    %v1836 = vadd.f32 %v1780, %v1835
    %1837 = vmatmul.f32.gmra.mxu0 %v442
    %v1838 = vpop.f32.mrf.mxu0
    %v1839 = vadd.f32 %v1780, %v1838
    %1840 = vmatmul.f32.gmra.mxu0 %v444
    %v1841 = vpop.f32.mrf.mxu0
    %v1842 = vadd.f32 %v1780, %v1841
    %1843 = vmatmul.f32.gmra.mxu0 %v446
    %v1844 = vpop.f32.mrf.mxu0
    %v1845 = vadd.f32 %v1780, %v1844
    %1846 = vmatmul.f32.gmra.mxu0 %v448
    %v1847 = vpop.f32.mrf.mxu0
    %v1848 = vadd.f32 %v1780, %v1847
    %1849 = vmatmul.f32.gmra.mxu0 %v450
    %v1850 = vpop.f32.mrf.mxu0
    %v1851 = vadd.f32 %v1780, %v1850
    %1852 = vmatmul.f32.gmra.mxu0 %v452
    %v1853 = vpop.f32.mrf.mxu0
    %v1854 = vadd.f32 %v1780, %v1853
    %1855 = vmatmul.f32.gmra.mxu0 %v454
    %v1856 = vpop.f32.mrf.mxu0
    %v1857 = vadd.f32 %v1780, %v1856
    %1858 = vmatmul.f32.gmra.mxu0 %v456
    %v1859 = vpop.f32.mrf.mxu0
    %v1860 = vadd.f32 %v1780, %v1859
    %1861 = vmatmul.f32.gmra.mxu0 %v458
    %v1862 = vpop.f32.mrf.mxu0
    %v1863 = vadd.f32 %v1780, %v1862
    %1864 = vmatmul.f32.gmra.mxu0 %v460
    %v1865 = vpop.f32.mrf.mxu0
    %v1866 = vadd.f32 %v1780, %v1865
    %1867 = vmatmul.f32.gmra.mxu0 %v462
    %v1868 = vpop.f32.mrf.mxu0
    %v1869 = vadd.f32 %v1780, %v1868
    %1870 = vmatmul.f32.gmra.mxu0 %v464
    %v1871 = vpop.f32.mrf.mxu0
    %v1872 = vadd.f32 %v1780, %v1871
    %1873 = vmatmul.f32.gmra.mxu0 %v466
    %v1874 = vpop.f32.mrf.mxu0
    %v1875 = vadd.f32 %v1780, %v1874
    %1876 = vmatmul.f32.gmra.mxu0 %v468
    %v1877 = vpop.f32.mrf.mxu0
    %v1878 = vadd.f32 %v1780, %v1877
    %1879 = vmatmul.f32.gmra.mxu0 %v470
    %v1880 = vpop.f32.mrf.mxu0
    %v1881 = vadd.f32 %v1780, %v1880
    %1882 = vmatmul.f32.gmra.mxu0 %v472
    %v1883 = vpop.f32.mrf.mxu0
    %v1884 = vadd.f32 %v1780, %v1883
    %1885 = vmatmul.f32.gmra.mxu0 %v474
    %v1886 = vpop.f32.mrf.mxu0
    %v1887 = vadd.f32 %v1780, %v1886
    %1888 = vmatmul.f32.gmra.mxu0 %v476
    %v1889 = vpop.f32.mrf.mxu0
    %v1890 = vadd.f32 %v1780, %v1889
    %1891 = vmatmul.f32.gmra.mxu0 %v478
    %v1892 = vpop.f32.mrf.mxu0
    %v1893 = vadd.f32 %v1780, %v1892
    %1894 = vdwg.mxu0
    %1895 = vmatpush.msra.mxu0 %v1777
    %1896 = vmatpush.msra.mxu0 %v1775
    %1897 = vmatpush.msra.mxu0 %v1772
    %1898 = vmatpush.msra.mxu0 %v1770
    %1899 = vmatpush.msra.mxu0 %v1767
    %1900 = vmatpush.msra.mxu0 %v1765
    %1901 = vmatpush.msra.mxu0 %v1762
    %1902 = vmatpush.msra.mxu0 %v1760
    %1903 = vmatpush.msra.mxu0 %v1757
    %1904 = vmatpush.msra.mxu0 %v1755
    %1905 = vmatpush.msra.mxu0 %v1752
    %1906 = vmatpush.msra.mxu0 %v1750
    %1907 = vmatpush.msra.mxu0 %v1747
    %1908 = vmatpush.msra.mxu0 %v1745
    %1909 = vmatpush.msra.mxu0 %v1742
    %1910 = vmatpush.msra.mxu0 %v1740
    %1911 = vmatmul.f32.gmra.mxu0 %v417
    %v1912 = vpop.f32.mrf.mxu0
    %v1913 = vadd.f32 %v1800, %v1912
    %1914 = vmatmul.f32.gmra.mxu0 %v419
    %v1915 = vpop.f32.mrf.mxu0
    %v1916 = vadd.f32 %v1803, %v1915
    %1917 = vmatmul.f32.gmra.mxu0 %v421
    %v1918 = vpop.f32.mrf.mxu0
    %v1919 = vadd.f32 %v1806, %v1918
    %1920 = vmatmul.f32.gmra.mxu0 %v423
    %v1921 = vpop.f32.mrf.mxu0
    %v1922 = vadd.f32 %v1809, %v1921
    %1923 = vmatmul.f32.gmra.mxu0 %v425
    %v1924 = vpop.f32.mrf.mxu0
    %v1925 = vadd.f32 %v1812, %v1924
    %1926 = vmatmul.f32.gmra.mxu0 %v427
    %v1927 = vpop.f32.mrf.mxu0
    %v1928 = vadd.f32 %v1815, %v1927
    %1929 = vmatmul.f32.gmra.mxu0 %v429
    %v1930 = vpop.f32.mrf.mxu0
    %v1931 = vadd.f32 %v1818, %v1930
    %1932 = vmatmul.f32.gmra.mxu0 %v431
    %v1933 = vpop.f32.mrf.mxu0
    %v1934 = vadd.f32 %v1821, %v1933
    %1935 = vmatmul.f32.gmra.mxu0 %v433
    %v1936 = vpop.f32.mrf.mxu0
    %v1937 = vadd.f32 %v1824, %v1936
    %1938 = vmatmul.f32.gmra.mxu0 %v435
    %v1939 = vpop.f32.mrf.mxu0
    %v1940 = vadd.f32 %v1827, %v1939
    %1941 = vmatmul.f32.gmra.mxu0 %v437
    %v1942 = vpop.f32.mrf.mxu0
    %v1943 = vadd.f32 %v1830, %v1942
    %1944 = vmatmul.f32.gmra.mxu0 %v439
    %v1945 = vpop.f32.mrf.mxu0
    %v1946 = vadd.f32 %v1833, %v1945
    %1947 = vmatmul.f32.gmra.mxu0 %v441
    %v1948 = vpop.f32.mrf.mxu0
    %v1949 = vadd.f32 %v1836, %v1948
    %1950 = vmatmul.f32.gmra.mxu0 %v443
    %v1951 = vpop.f32.mrf.mxu0
    %v1952 = vadd.f32 %v1839, %v1951
    %1953 = vmatmul.f32.gmra.mxu0 %v445
    %v1954 = vpop.f32.mrf.mxu0
    %v1955 = vadd.f32 %v1842, %v1954
    %1956 = vmatmul.f32.gmra.mxu0 %v447
    %v1957 = vpop.f32.mrf.mxu0
    %v1958 = vadd.f32 %v1845, %v1957
    %1959 = vmatmul.f32.gmra.mxu0 %v449
    %v1960 = vpop.f32.mrf.mxu0
    %v1961 = vadd.f32 %v1848, %v1960
    %1962 = vmatmul.f32.gmra.mxu0 %v451
    %v1963 = vpop.f32.mrf.mxu0
    %v1964 = vadd.f32 %v1851, %v1963
    %1965 = vmatmul.f32.gmra.mxu0 %v453
    %v1966 = vpop.f32.mrf.mxu0
    %v1967 = vadd.f32 %v1854, %v1966
    %1968 = vmatmul.f32.gmra.mxu0 %v455
    %v1969 = vpop.f32.mrf.mxu0
    %v1970 = vadd.f32 %v1857, %v1969
    %1971 = vmatmul.f32.gmra.mxu0 %v457
    %v1972 = vpop.f32.mrf.mxu0
    %v1973 = vadd.f32 %v1860, %v1972
    %1974 = vmatmul.f32.gmra.mxu0 %v459
    %v1975 = vpop.f32.mrf.mxu0
    %v1976 = vadd.f32 %v1863, %v1975
    %1977 = vmatmul.f32.gmra.mxu0 %v461
    %v1978 = vpop.f32.mrf.mxu0
    %v1979 = vadd.f32 %v1866, %v1978
    %1980 = vmatmul.f32.gmra.mxu0 %v463
    %v1981 = vpop.f32.mrf.mxu0
    %v1982 = vadd.f32 %v1869, %v1981
    %1983 = vmatmul.f32.gmra.mxu0 %v465
    %v1984 = vpop.f32.mrf.mxu0
    %v1985 = vadd.f32 %v1872, %v1984
    %1986 = vmatmul.f32.gmra.mxu0 %v467
    %v1987 = vpop.f32.mrf.mxu0
    %v1988 = vadd.f32 %v1875, %v1987
    %1989 = vmatmul.f32.gmra.mxu0 %v469
    %v1990 = vpop.f32.mrf.mxu0
    %v1991 = vadd.f32 %v1878, %v1990
    %1992 = vmatmul.f32.gmra.mxu0 %v471
    %v1993 = vpop.f32.mrf.mxu0
    %v1994 = vadd.f32 %v1881, %v1993
    %1995 = vmatmul.f32.gmra.mxu0 %v473
    %v1996 = vpop.f32.mrf.mxu0
    %v1997 = vadd.f32 %v1884, %v1996
    %1998 = vmatmul.f32.gmra.mxu0 %v475
    %v1999 = vpop.f32.mrf.mxu0
    %v2000 = vadd.f32 %v1887, %v1999
    %2001 = vmatmul.f32.gmra.mxu0 %v477
    %v2002 = vpop.f32.mrf.mxu0
    %v2003 = vadd.f32 %v1890, %v2002
    %2004 = vmatmul.f32.gmra.mxu0 %v479
    %v2005 = vpop.f32.mrf.mxu0
    %v2006 = vadd.f32 %v1893, %v2005
    %2007 = vdwg.mxu0
    %v2008 = vmax.f32 %v1913, 0.0
    %v2009 = vmax.f32 %v1916, 0.0
    %v2010 = vmax.f32 %v1919, 0.0
    %v2011 = vmax.f32 %v1922, 0.0
    %v2012 = vmax.f32 %v1925, 0.0
    %v2013 = vmax.f32 %v1928, 0.0
    %v2014 = vmax.f32 %v1931, 0.0
    %v2015 = vmax.f32 %v1934, 0.0
    %v2016 = vmax.f32 %v1937, 0.0
    %v2017 = vmax.f32 %v1940, 0.0
    %v2018 = vmax.f32 %v1943, 0.0
    %v2019 = vmax.f32 %v1946, 0.0
    %v2020 = vmax.f32 %v1949, 0.0
    %v2021 = vmax.f32 %v1952, 0.0
    %v2022 = vmax.f32 %v1955, 0.0
    %v2023 = vmax.f32 %v1958, 0.0
    %v2024 = vmax.f32 %v1961, 0.0
    %v2025 = vmax.f32 %v1964, 0.0
    %v2026 = vmax.f32 %v1967, 0.0
    %v2027 = vmax.f32 %v1970, 0.0
    %v2028 = vmax.f32 %v1973, 0.0
    %v2029 = vmax.f32 %v1976, 0.0
    %v2030 = vmax.f32 %v1979, 0.0
    %v2031 = vmax.f32 %v1982, 0.0
    %v2032 = vmax.f32 %v1985, 0.0
    %v2033 = vmax.f32 %v1988, 0.0
    %v2034 = vmax.f32 %v1991, 0.0
    %v2035 = vmax.f32 %v1994, 0.0
    %v2036 = vmax.f32 %v1997, 0.0
    %v2037 = vmax.f32 %v2000, 0.0
    %v2038 = vmax.f32 %v2003, 0.0
    %v2039 = vmax.f32 %v2006, 0.0
    %v2040 = vpack.c.bf16 %v2008, %v2008
    %v2041 = vpack.c.bf16 %v2009, %v2009
    %v2042 = vpack.c.bf16 %v2010, %v2010
    %v2043 = vpack.c.bf16 %v2011, %v2011
    %v2044 = vpack.c.bf16 %v2012, %v2012
    %v2045 = vpack.c.bf16 %v2013, %v2013
    %v2046 = vpack.c.bf16 %v2014, %v2014
    %v2047 = vpack.c.bf16 %v2015, %v2015
    %v2048 = vpack.c.bf16 %v2016, %v2016
    %v2049 = vpack.c.bf16 %v2017, %v2017
    %v2050 = vpack.c.bf16 %v2018, %v2018
    %v2051 = vpack.c.bf16 %v2019, %v2019
    %v2052 = vpack.c.bf16 %v2020, %v2020
    %v2053 = vpack.c.bf16 %v2021, %v2021
    %v2054 = vpack.c.bf16 %v2022, %v2022
    %v2055 = vpack.c.bf16 %v2023, %v2023
    %v2056 = vpack.c.bf16 %v2024, %v2024
    %v2057 = vpack.c.bf16 %v2025, %v2025
    %v2058 = vpack.c.bf16 %v2026, %v2026
    %v2059 = vpack.c.bf16 %v2027, %v2027
    %v2060 = vpack.c.bf16 %v2028, %v2028
    %v2061 = vpack.c.bf16 %v2029, %v2029
    %v2062 = vpack.c.bf16 %v2030, %v2030
    %v2063 = vpack.c.bf16 %v2031, %v2031
    %v2064 = vpack.c.bf16 %v2032, %v2032
    %v2065 = vpack.c.bf16 %v2033, %v2033
    %v2066 = vpack.c.bf16 %v2034, %v2034
    %v2067 = vpack.c.bf16 %v2035, %v2035
    %v2068 = vpack.c.bf16 %v2036, %v2036
    %v2069 = vpack.c.bf16 %v2037, %v2037
    %v2070 = vpack.c.bf16 %v2038, %v2038
    %v2071 = vpack.c.bf16 %v2039, %v2039
    %v2072 = vunpack.c.l.bf16 %v2040
    %v2073 = vunpack.c.l.bf16 %v2041
    %v2074 = vunpack.c.l.bf16 %v2042
    %v2075 = vunpack.c.l.bf16 %v2043
    %v2076 = vunpack.c.l.bf16 %v2044
    %v2077 = vunpack.c.l.bf16 %v2045
    %v2078 = vunpack.c.l.bf16 %v2046
    %v2079 = vunpack.c.l.bf16 %v2047
    %v2080 = vunpack.c.l.bf16 %v2048
    %v2081 = vunpack.c.l.bf16 %v2049
    %v2082 = vunpack.c.l.bf16 %v2050
    %v2083 = vunpack.c.l.bf16 %v2051
    %v2084 = vunpack.c.l.bf16 %v2052
    %v2085 = vunpack.c.l.bf16 %v2053
    %v2086 = vunpack.c.l.bf16 %v2054
    %v2087 = vunpack.c.l.bf16 %v2055
    %v2088 = vunpack.c.l.bf16 %v2056
    %v2089 = vunpack.c.l.bf16 %v2057
    %v2090 = vunpack.c.l.bf16 %v2058
    %v2091 = vunpack.c.l.bf16 %v2059
    %v2092 = vunpack.c.l.bf16 %v2060
    %v2093 = vunpack.c.l.bf16 %v2061
    %v2094 = vunpack.c.l.bf16 %v2062
    %v2095 = vunpack.c.l.bf16 %v2063
    %v2096 = vunpack.c.l.bf16 %v2064
    %v2097 = vunpack.c.l.bf16 %v2065
    %v2098 = vunpack.c.l.bf16 %v2066
    %v2099 = vunpack.c.l.bf16 %v2067
    %v2100 = vunpack.c.l.bf16 %v2068
    %v2101 = vunpack.c.l.bf16 %v2069
    %v2102 = vunpack.c.l.bf16 %v2070
    %v2103 = vunpack.c.l.bf16 %v2071
    %2104 = vst [vmem:[%s6] sm:$0xff] %v2072
    %2105 = vst [vmem:[%s6 + $0x8] sm:$0xff] %v2073
    %2106 = vst [vmem:[%s6 + $0x10] sm:$0xff] %v2074
    %2107 = vst [vmem:[%s6 + $0x18] sm:$0xff] %v2075
    %2108 = vst [vmem:[%s6 + $0x20] sm:$0xff] %v2076
    %2109 = vst [vmem:[%s6 + $0x28] sm:$0xff] %v2077
    %2110 = vst [vmem:[%s6 + $0x30] sm:$0xff] %v2078
    %2111 = vst [vmem:[%s6 + $0x38] sm:$0xff] %v2079
    %2112 = vst [vmem:[%s6 + $0x40] sm:$0xff] %v2080
    %2113 = vst [vmem:[%s6 + $0x48] sm:$0xff] %v2081
    %2114 = vst [vmem:[%s6 + $0x50] sm:$0xff] %v2082
    %2115 = vst [vmem:[%s6 + $0x58] sm:$0xff] %v2083
    %2116 = vst [vmem:[%s6 + $0x60] sm:$0xff] %v2084
    %2117 = vst [vmem:[%s6 + $0x68] sm:$0xff] %v2085
    %2118 = vst [vmem:[%s6 + $0x70] sm:$0xff] %v2086
    %2119 = vst [vmem:[%s6 + $0x78] sm:$0xff] %v2087
    %2120 = vst [vmem:[%s6 + $0x80] sm:$0xff] %v2088
    %2121 = vst [vmem:[%s6 + $0x88] sm:$0xff] %v2089
    %2122 = vst [vmem:[%s6 + $0x90] sm:$0xff] %v2090
    %2123 = vst [vmem:[%s6 + $0x98] sm:$0xff] %v2091
    %2124 = vst [vmem:[%s6 + $0xa0] sm:$0xff] %v2092
    %2125 = vst [vmem:[%s6 + $0xa8] sm:$0xff] %v2093
    %2126 = vst [vmem:[%s6 + $0xb0] sm:$0xff] %v2094
    %2127 = vst [vmem:[%s6 + $0xb8] sm:$0xff] %v2095
    %2128 = vst [vmem:[%s6 + $0xc0] sm:$0xff] %v2096
    %2129 = vst [vmem:[%s6 + $0xc8] sm:$0xff] %v2097
    %2130 = vst [vmem:[%s6 + $0xd0] sm:$0xff] %v2098
    %2131 = vst [vmem:[%s6 + $0xd8] sm:$0xff] %v2099
    %2132 = vst [vmem:[%s6 + $0xe0] sm:$0xff] %v2100
    %2133 = vst [vmem:[%s6 + $0xe8] sm:$0xff] %v2101
    %2134 = vst [vmem:[%s6 + $0xf0] sm:$0xff] %v2102
    %2135 = vst [vmem:[%s6 + $0xf8] sm:$0xff] %v2103
    // Predicated region
    $region30: #{gnn_forward.1} parent=1 // pred_check
      _
    $region31: #{gnn_forward.1} parent=1 // pred_check_branch
      %2137 = sbr.rel (0) target = $region33
    $region32: #{gnn_forward.1} parent=1 // pred_region
      _
    $region33: #{gnn_forward.1} parent=1 // pred_fallthru
      _
    // Predicated region
    $region34: #{gnn_forward.1} parent=1 // pred_check
      _
    $region35: #{gnn_forward.1} parent=1 // pred_check_branch
      %2139 = sbr.rel (0) target = $region37
    $region36: #{gnn_forward.1} parent=1 // pred_region
      _
    $region37: #{gnn_forward.1} parent=1 // pred_fallthru
      _
    %2140 = vsyncpa [#allocation3], 1

</llo_original>
